<compile_context>
chip_gen: v5e
topology: v5e:2x2
jax: 0.10.0
libtpu: 0.0.40
codegen_flags: <defaults>
</compile_context>

<pallas_src>
import math

import jax
import jax.numpy as jnp
from jax.experimental import pallas as pl
from jax.experimental.pallas import tpu as pltpu  # noqa: F401  (kept per convention)

# ----- model hyper-parameters (small, consistent with the module) -----
B = 2          # batch
SQ = 8         # seq length of repr1 (queries)
SK = 8         # seq length of repr2 (keys/values)
D_MODEL = 32
D_FFN = 64
N_HEADS = 4
D_K = 8
D_V = 8        # n_heads * d_v == d_model so the residual add is shape-valid
LN_EPS = 1e-6

ROWS_Q = B * SQ                      # 16 query rows
ROWS_KV = B * SK                     # 16 key/value rows
D_Q = N_HEADS * D_K                  # 32 q-projection columns
K_OFF = D_Q                          # k columns start at 32
V_OFF = D_Q + N_HEADS * D_K          # v columns start at 64
D_QKV = V_OFF + N_HEADS * D_V        # 96 fused projection columns

# qkv slab layout (rows): [0,96) identity block, [96,128) weights, row 128 bias row
QKV_W_ROW = D_QKV                    # 96
QKV_ROWS = D_QKV + D_MODEL + 1       # 129

# ffn slab layout (rows, lane width 64): [0,32) w1, [32,96) w2 (zero-padded lanes),
# row 96 b1, rows 97/98/99 gamma/beta/b2 (zero-padded lanes)
FFN_W2_ROW = D_MODEL                 # 32
FFN_B1_ROW = D_MODEL + D_FFN         # 96
FFN_G_ROW = FFN_B1_ROW + 1           # 97
FFN_BETA_ROW = FFN_B1_ROW + 2        # 98
FFN_B2_ROW = FFN_B1_ROW + 3          # 99
FFN_ROWS = FFN_B1_ROW + 4            # 100


def joint_encoder_kernel(x_ref, qkv_ref, ffn_ref, o_ref):
    """Single invocation; inputs + params + activations (<200 KB) all live in VMEM."""
    x_aug = x_ref[...]                                     # (32, 33): [x1;x2], lane 32 == 1.0

    # ---- fused q/k/v projection: one MXU tile, biases folded via the ones column ----
    w_qkv = qkv_ref[QKV_W_ROW:QKV_ROWS, :]                 # (33, 96) = [W; bias row]
    proj = jnp.dot(x_aug, w_qkv, preferred_element_type=jnp.float32)   # (32, 96)
    proj_q = proj[0:ROWS_Q, :]                             # (16, 96) -- q cols 0:32 valid
    proj_kv = proj[ROWS_Q:ROWS_Q + ROWS_KV, :]             # (16, 96) -- k/v cols 32:96 valid

    # ---- per-head attention ----
    # Head extraction and context placement ride the (idle) MXU via 0/1 selection
    # matmuls against sublane slices of the identity block in qkv_ref -- no
    # lane-offset slices or lane concatenates anywhere in the loop.
    ctx = jnp.zeros((ROWS_Q, D_QKV), jnp.float32)          # heads land in lanes 0:32
    for h in range(N_HEADS):
        sel_q = qkv_ref[h * D_K:(h + 1) * D_K, :]                          # (8, 96)
        sel_k = qkv_ref[K_OFF + h * D_K:K_OFF + (h + 1) * D_K, :]          # (8, 96)
        sel_v = qkv_ref[V_OFF + h * D_V:V_OFF + (h + 1) * D_V, :]          # (8, 96)

        qh = jnp.einsum('nd,jd->nj', proj_q, sel_q,
                        preferred_element_type=jnp.float32).reshape(B, SQ, D_K)
        kh = jnp.einsum('nd,jd->nj', proj_kv, sel_k,
                        preferred_element_type=jnp.float32).reshape(B, SK, D_K)
        vh = jnp.einsum('nd,jd->nj', proj_kv, sel_v,
                        preferred_element_type=jnp.float32).reshape(B, SK, D_V)

        # scores already carry the module's literal (q @ k^T) / dk**(-0.5) scale
        # (== multiply by sqrt(dk); folded into wq/bq at pack time).
        s = jnp.einsum('bqd,bkd->bqk', qh, kh, preferred_element_type=jnp.float32)
        s = s - jnp.max(s, axis=-1, keepdims=True)
        p = jnp.exp(s)
        p = p / jnp.sum(p, axis=-1, keepdims=True)          # exact softmax (no approx recip)

        ctx_h = jnp.einsum('bqk,bkd->bqd', p, vh,
                           preferred_element_type=jnp.float32).reshape(ROWS_Q, D_V)
        # Place head h at lanes h*8:(h+1)*8 with the same selection block (valid
        # because dk == dv, so q-layout == output-concat layout).
        ctx = ctx + jnp.dot(ctx_h, sel_q, preferred_element_type=jnp.float32)

    # dropout (eval) -> identity; residual add with repr1
    x1 = x_aug[0:ROWS_Q, 0:D_MODEL]                        # (16, 32)
    mha = ctx[:, 0:D_MODEL] + x1                           # (16, 32)

    # ---- FeedForward: y = layer_norm(mha); out = w2(relu(w1 y + b1)) + b2 + y ----
    # mean/var reductions as ones-matmuls (MXU) instead of masked cross-lane reduces.
    inv_d = jnp.full((D_MODEL, 8), 1.0 / D_MODEL, jnp.float32)
    mean = jnp.dot(mha, inv_d, preferred_element_type=jnp.float32)[:, 0:1]      # (16, 1)
    cent = mha - mean
    var = jnp.dot(cent * cent, inv_d, preferred_element_type=jnp.float32)[:, 0:1]
    gamma = ffn_ref[FFN_G_ROW:FFN_G_ROW + 1, 0:D_MODEL]
    beta = ffn_ref[FFN_BETA_ROW:FFN_BETA_ROW + 1, 0:D_MODEL]
    y = cent * jax.lax.rsqrt(var + LN_EPS) * gamma + beta   # (16, 32) -- FFN residual

    w1 = ffn_ref[0:D_MODEL, :]                              # (32, 64)
    b1 = ffn_ref[FFN_B1_ROW:FFN_B1_ROW + 1, :]              # (1, 64)
    h1 = jnp.maximum(jnp.dot(y, w1, preferred_element_type=jnp.float32) + b1, 0.0)
    w2p = ffn_ref[FFN_W2_ROW:FFN_W2_ROW + D_FFN, :]         # (64, 64), lanes 32:64 zero
    f = jnp.dot(h1, w2p, preferred_element_type=jnp.float32)                # (16, 64)
    b2 = ffn_ref[FFN_B2_ROW:FFN_B2_ROW + 1, 0:D_MODEL]

    o_ref[...] = f[:, 0:D_MODEL] + b2 + y                   # (16, 32)


def pack_params(params):
    """One-time parameter packing (outside the hot path):
       * fold the module's literal attention scale into wq/bq,
       * fuse [wq|wk|wv] + bias row + identity block into one qkv slab,
       * pack w1/w2/b1/gamma/beta/b2 into one lane-width-64 ffn slab."""
    (wq, bq, wk, bk, wv, bv, gamma, beta, w1, b1, w2, b2) = params
    q_scale = float(D_K) ** 0.5           # 1 / factor, factor = dk**(-0.5) in the module
    w_fused = jnp.concatenate([wq * q_scale, wk, wv], axis=1)            # (32, 96)
    b_fused = jnp.concatenate([bq * q_scale, bk, bv])[None, :]           # (1, 96)
    eye = jnp.eye(D_QKV, dtype=jnp.float32)                              # (96, 96)
    qkv_slab = jnp.concatenate([eye, w_fused, b_fused], axis=0)          # (129, 96)

    w2p = jnp.pad(w2, ((0, 0), (0, D_FFN - D_MODEL)))                    # (64, 64)
    pad32 = lambda v: jnp.pad(v, (0, D_FFN - D_MODEL))[None, :]          # (1, 64)
    ffn_slab = jnp.concatenate(
        [w1, w2p, b1[None, :], pad32(gamma), pad32(beta), pad32(b2)], axis=0)  # (100, 64)
    assert qkv_slab.shape == (QKV_ROWS, D_QKV) and ffn_slab.shape == (FFN_ROWS, D_FFN)
    return qkv_slab.astype(jnp.float32), ffn_slab.astype(jnp.float32)


def joint_encoder_layer(repr1, repr2, packed):
    """repr1: (B, SQ, D_MODEL), repr2: (B, SK, D_MODEL) -> (B, SQ, D_MODEL)."""
    qkv_slab, ffn_slab = packed

    # Flatten batch into rows and append the constant-1 bias column (free XLA plumbing).
    x1 = repr1.reshape(B * SQ, D_MODEL)
    x2 = repr2.reshape(B * SK, D_MODEL)
    x_pack = jnp.concatenate(
        [jnp.concatenate([x1, jnp.ones((B * SQ, 1), jnp.float32)], axis=1),
         jnp.concatenate([x2, jnp.ones((B * SK, 1), jnp.float32)], axis=1)], axis=0)  # (32, 33)

    def full_spec(a):
        return pl.BlockSpec(a.shape, lambda *_: (0,) * a.ndim)

    # Advisory cost estimate so XLA can overlap neighbouring HLO with this tiny call.
    flops = 2 * (
        x_pack.shape[0] * x_pack.shape[1] * D_QKV                  # fused projection
        + N_HEADS * 3 * ROWS_Q * D_QKV * D_K                       # head-selection matmuls
        + N_HEADS * B * SQ * SK * (D_K + D_V)                      # attention
        + N_HEADS * ROWS_Q * D_V * D_QKV                           # context placement
        + 2 * ROWS_Q * D_MODEL * 8                                 # layernorm reductions
        + ROWS_Q * D_MODEL * D_FFN + ROWS_Q * D_FFN * D_FFN)       # FFN
    bytes_accessed = 4 * (x_pack.size + qkv_slab.size + ffn_slab.size + ROWS_Q * D_MODEL)
    cost = pl.CostEstimate(flops=int(flops),
                           transcendentals=N_HEADS * B * SQ * SK + ROWS_Q,
                           bytes_accessed=int(bytes_accessed))

    out = pl.pallas_call(
        joint_encoder_kernel,
        out_shape=jax.ShapeDtypeStruct((B * SQ, D_MODEL), jnp.float32),
        in_specs=[full_spec(x_pack), full_spec(qkv_slab), full_spec(ffn_slab)],
        out_specs=pl.BlockSpec((B * SQ, D_MODEL), lambda *_: (0, 0)),
        cost_estimate=cost,
        # No grid: the whole problem fits one MXU tile, so per-step grid overhead
        # (~0.35 us) would dominate.  If B / sequence lengths grow, add a leading grid
        # axis over row tiles with
        #   compiler_params=pltpu.CompilerParams(dimension_semantics=("parallel",))
        # so the work shards across v7x's 2 TensorCores, and re-derive VMEM usage
        # against v7x's 64 MiB (32 MiB default scoped) budget, not v5e/v6e's 128 MiB.
    )(x_pack, qkv_slab, ffn_slab)

    return out.reshape(B, SQ, D_MODEL)


def make_params(key):
    """Deterministic synthetic parameters matching the nn.Module shapes.
    Linear weights are stored transposed relative to nn.Linear (i.e. (in, out)),
    so both kernel and reference compute x @ W + b."""
    ks = jax.random.split(key, 12)

    def lin(kw, kb, fan_in, fan_out):
        w = jax.random.normal(kw, (fan_in, fan_out), jnp.float32) / math.sqrt(fan_in)
        b = 0.1 * jax.random.normal(kb, (fan_out,), jnp.float32)
        return w, b

    wq, bq = lin(ks[0], ks[1], D_MODEL, N_HEADS * D_K)
    wk, bk = lin(ks[2], ks[3], D_MODEL, N_HEADS * D_K)
    wv, bv = lin(ks[4], ks[5], D_MODEL, N_HEADS * D_V)
    # (MHA's fc and layer_norm exist in __init__ but are unused in forward -> omitted)
    gamma = 1.0 + 0.1 * jax.random.normal(ks[6], (D_MODEL,), jnp.float32)
    beta = 0.1 * jax.random.normal(ks[7], (D_MODEL,), jnp.float32)
    w1, b1 = lin(ks[8], ks[9], D_MODEL, D_FFN)
    w2, b2 = lin(ks[10], ks[11], D_FFN, D_MODEL)
    return (wq, bq, wk, bk, wv, bv, gamma, beta, w1, b1, w2, b2)


def reference(repr1, repr2, params):
    """Pure-JAX reference mirroring the PyTorch forward literally (eval mode).
    Explicit HIGHEST matmul precision so the comparison is meaningful at ~1e-4."""
    HI = jax.lax.Precision.HIGHEST
    (wq, bq, wk, bk, wv, bv, gamma, beta, w1, b1, w2, b2) = params
    q = jnp.matmul(repr1, wq, precision=HI) + bq
    k = jnp.matmul(repr2, wk, precision=HI) + bk
    v = jnp.matmul(repr2, wv, precision=HI) + bv
    q = q.reshape(B, SQ, N_HEADS, D_K).transpose(0, 2, 1, 3)
    k = k.reshape(B, SK, N_HEADS, D_K).transpose(0, 2, 1, 3)
    v = v.reshape(B, SK, N_HEADS, D_V).transpose(0, 2, 1, 3)
    factor = D_K ** (-0.5)                       # basicAtnModule(factor=dk**-0.5)
    attn = jnp.einsum("bhqd,bhkd->bhqk", q, k, precision=HI) / factor  # literal: / factor
    attn = jax.nn.softmax(attn, axis=-1)
    ctx = jnp.einsum("bhqk,bhkd->bhqd", attn, v, precision=HI)
    ctx = ctx.transpose(0, 2, 1, 3).reshape(B, SQ, N_HEADS * D_V)
    mha = ctx + repr1
    mean = jnp.mean(mha, axis=-1, keepdims=True)
    var = jnp.mean((mha - mean) ** 2, axis=-1, keepdims=True)
    y = (mha - mean) / jnp.sqrt(var + LN_EPS) * gamma + beta
    h1 = jnp.maximum(jnp.matmul(y, w1, precision=HI) + b1, 0.0)
    f = jnp.matmul(h1, w2, precision=HI) + b2
    return f + y


if __name__ == "__main__":
    key = jax.random.PRNGKey(0)
    k1, k2, kp = jax.random.split(key, 3)
    repr1 = jax.random.normal(k1, (B, SQ, D_MODEL), jnp.float32)
    repr2 = jax.random.normal(k2, (B, SK, D_MODEL), jnp.float32)
    params = make_params(kp)
    packed = pack_params(params)        # one-time prep (scale fold + fusion + slab packing)

    out = joint_encoder_layer(repr1, repr2, packed)
    out = jax.block_until_ready(out)

    ref = reference(repr1, repr2, params)
    assert out.shape == (B, SQ, D_MODEL)
    max_err = float(jnp.max(jnp.abs(out - ref)))
    # Exact softmax + full-precision f32 matmuls inside the kernel: agreement with the
    # high-precision reference is ~1e-5; 1e-3 keeps margin while still catching any
    # structural bug (a mis-sliced head or bias is an O(0.1)+ error).
    assert max_err < 1e-3, f"mismatch vs pure-JAX reference: max abs err = {max_err}"

    print("KERNEL_OK")
</pallas_src>

<mosaic_0001>
module attributes {stable_mosaic.version = 11 : i64} {
  func.func @joint_encoder_kernel(%arg0: memref<32x33xf32, #tpu.memory_space<vmem>>, %arg1: memref<129x96xf32, #tpu.memory_space<vmem>>, %arg2: memref<100x64xf32, #tpu.memory_space<vmem>>, %arg3: memref<16x32xf32, #tpu.memory_space<vmem>>) attributes {dimension_semantics = [], scalar_prefetch = 0 : i64, scratch_operands = 0 : i64, tpu.core_type = #tpu.core_type<tc>} {
    %c0 = arith.constant 0 : index
    %c0_0 = arith.constant 0 : index
    %0 = vector.load %arg0[%c0, %c0_0] : memref<32x33xf32, #tpu.memory_space<vmem>>, vector<32x33xf32>
    %c96 = arith.constant 96 : index
    %c0_1 = arith.constant 0 : index
    %1 = vector.load %arg1[%c96, %c0_1] : memref<129x96xf32, #tpu.memory_space<vmem>>, vector<33x96xf32>
    %cst = arith.constant dense<0.000000e+00> : vector<32x96xf32>
    %2 = tpu.matmul %0, %1, %cst {dimension_numbers = #tpu.dot_dimension_numbers<[1], [0], [0], [1], [0, 0, 1, 1], [], []>} : vector<32x33xf32>, vector<33x96xf32>, vector<32x96xf32> -> vector<32x96xf32>
    %3 = vector.extract_strided_slice %2 {offsets = [0, 0], sizes = [16, 96], strides = [1, 1]} : vector<32x96xf32> to vector<16x96xf32>
    %4 = vector.extract_strided_slice %2 {offsets = [16, 0], sizes = [16, 96], strides = [1, 1]} : vector<32x96xf32> to vector<16x96xf32>
    %cst_2 = arith.constant 0.000000e+00 : f32
    %5 = vector.broadcast %cst_2 : f32 to vector<16x96xf32>
    %c0_3 = arith.constant 0 : index
    %c0_4 = arith.constant 0 : index
    %6 = vector.load %arg1[%c0_3, %c0_4] : memref<129x96xf32, #tpu.memory_space<vmem>>, vector<8x96xf32>
    %c32 = arith.constant 32 : index
    %c0_5 = arith.constant 0 : index
    %7 = vector.load %arg1[%c32, %c0_5] : memref<129x96xf32, #tpu.memory_space<vmem>>, vector<8x96xf32>
    %c64 = arith.constant 64 : index
    %c0_6 = arith.constant 0 : index
    %8 = vector.load %arg1[%c64, %c0_6] : memref<129x96xf32, #tpu.memory_space<vmem>>, vector<8x96xf32>
    "tpu.trace_start"() <{level = 10 : i32, message = "nd,jd->nj"}> : () -> ()
    %cst_7 = arith.constant dense<0.000000e+00> : vector<16x8xf32>
    %9 = tpu.matmul %3, %6, %cst_7 {dimension_numbers = #tpu.dot_dimension_numbers<[1], [1], [0], [0], [0, 0, 1, 0], [], []>} : vector<16x96xf32>, vector<8x96xf32>, vector<16x8xf32> -> vector<16x8xf32>
    "tpu.trace_stop"() : () -> ()
    %10 = vector.shape_cast %9 : vector<16x8xf32> to vector<2x8x8xf32>
    "tpu.trace_start"() <{level = 10 : i32, message = "nd,jd->nj"}> : () -> ()
    %cst_8 = arith.constant dense<0.000000e+00> : vector<16x8xf32>
    %11 = tpu.matmul %4, %7, %cst_8 {dimension_numbers = #tpu.dot_dimension_numbers<[1], [1], [0], [0], [0, 0, 1, 0], [], []>} : vector<16x96xf32>, vector<8x96xf32>, vector<16x8xf32> -> vector<16x8xf32>
    "tpu.trace_stop"() : () -> ()
    %12 = vector.shape_cast %11 : vector<16x8xf32> to vector<2x8x8xf32>
    "tpu.trace_start"() <{level = 10 : i32, message = "nd,jd->nj"}> : () -> ()
    %cst_9 = arith.constant dense<0.000000e+00> : vector<16x8xf32>
    %13 = tpu.matmul %4, %8, %cst_9 {dimension_numbers = #tpu.dot_dimension_numbers<[1], [1], [0], [0], [0, 0, 1, 0], [], []>} : vector<16x96xf32>, vector<8x96xf32>, vector<16x8xf32> -> vector<16x8xf32>
    "tpu.trace_stop"() : () -> ()
    %14 = vector.shape_cast %13 : vector<16x8xf32> to vector<2x8x8xf32>
    "tpu.trace_start"() <{level = 10 : i32, message = "bqd,bkd->bqk"}> : () -> ()
    %cst_10 = arith.constant dense<0.000000e+00> : vector<2x8x8xf32>
    %15 = tpu.matmul %10, %12, %cst_10 {dimension_numbers = #tpu.dot_dimension_numbers<[2], [2], [1], [1], [0, 0, 0, 1, 1, 1], [0], [0]>} : vector<2x8x8xf32>, vector<2x8x8xf32>, vector<2x8x8xf32> -> vector<2x8x8xf32>
    "tpu.trace_stop"() : () -> ()
    %cst_11 = arith.constant dense<0xFF800000> : vector<2x8xf32>
    %16 = vector.multi_reduction <maximumf>, %15, %cst_11 [2] : vector<2x8x8xf32> to vector<2x8xf32>
    %17 = vector.shape_cast %16 : vector<2x8xf32> to vector<2x8x1xf32>
    %18 = vector.broadcast %17 : vector<2x8x1xf32> to vector<2x8x8xf32>
    %19 = arith.subf %15, %18 : vector<2x8x8xf32>
    %20 = math.exp %19 : vector<2x8x8xf32>
    %cst_12 = arith.constant dense<0.000000e+00> : vector<2x8xf32>
    %21 = vector.multi_reduction <add>, %20, %cst_12 [2] : vector<2x8x8xf32> to vector<2x8xf32>
    %22 = vector.shape_cast %21 : vector<2x8xf32> to vector<2x8x1xf32>
    %23 = vector.broadcast %22 : vector<2x8x1xf32> to vector<2x8x8xf32>
    %24 = arith.divf %20, %23 : vector<2x8x8xf32>
    "tpu.trace_start"() <{level = 10 : i32, message = "bqk,bkd->bqd"}> : () -> ()
    %cst_13 = arith.constant dense<0.000000e+00> : vector<2x8x8xf32>
    %25 = tpu.matmul %24, %14, %cst_13 {dimension_numbers = #tpu.dot_dimension_numbers<[2], [1], [1], [2], [0, 0, 0, 1, 1, 2], [0], [0]>} : vector<2x8x8xf32>, vector<2x8x8xf32>, vector<2x8x8xf32> -> vector<2x8x8xf32>
    "tpu.trace_stop"() : () -> ()
    %26 = vector.shape_cast %25 : vector<2x8x8xf32> to vector<16x8xf32>
    %cst_14 = arith.constant dense<0.000000e+00> : vector<16x96xf32>
    %27 = tpu.matmul %26, %6, %cst_14 {dimension_numbers = #tpu.dot_dimension_numbers<[1], [0], [0], [1], [0, 0, 1, 1], [], []>} : vector<16x8xf32>, vector<8x96xf32>, vector<16x96xf32> -> vector<16x96xf32>
    %28 = arith.addf %5, %27 : vector<16x96xf32>
    %c8 = arith.constant 8 : index
    %c0_15 = arith.constant 0 : index
    %29 = vector.load %arg1[%c8, %c0_15] : memref<129x96xf32, #tpu.memory_space<vmem>>, vector<8x96xf32>
    %c40 = arith.constant 40 : index
    %c0_16 = arith.constant 0 : index
    %30 = vector.load %arg1[%c40, %c0_16] : memref<129x96xf32, #tpu.memory_space<vmem>>, vector<8x96xf32>
    %c72 = arith.constant 72 : index
    %c0_17 = arith.constant 0 : index
    %31 = vector.load %arg1[%c72, %c0_17] : memref<129x96xf32, #tpu.memory_space<vmem>>, vector<8x96xf32>
    "tpu.trace_start"() <{level = 10 : i32, message = "nd,jd->nj"}> : () -> ()
    %cst_18 = arith.constant dense<0.000000e+00> : vector<16x8xf32>
    %32 = tpu.matmul %3, %29, %cst_18 {dimension_numbers = #tpu.dot_dimension_numbers<[1], [1], [0], [0], [0, 0, 1, 0], [], []>} : vector<16x96xf32>, vector<8x96xf32>, vector<16x8xf32> -> vector<16x8xf32>
    "tpu.trace_stop"() : () -> ()
    %33 = vector.shape_cast %32 : vector<16x8xf32> to vector<2x8x8xf32>
    "tpu.trace_start"() <{level = 10 : i32, message = "nd,jd->nj"}> : () -> ()
    %cst_19 = arith.constant dense<0.000000e+00> : vector<16x8xf32>
    %34 = tpu.matmul %4, %30, %cst_19 {dimension_numbers = #tpu.dot_dimension_numbers<[1], [1], [0], [0], [0, 0, 1, 0], [], []>} : vector<16x96xf32>, vector<8x96xf32>, vector<16x8xf32> -> vector<16x8xf32>
    "tpu.trace_stop"() : () -> ()
    %35 = vector.shape_cast %34 : vector<16x8xf32> to vector<2x8x8xf32>
    "tpu.trace_start"() <{level = 10 : i32, message = "nd,jd->nj"}> : () -> ()
    %cst_20 = arith.constant dense<0.000000e+00> : vector<16x8xf32>
    %36 = tpu.matmul %4, %31, %cst_20 {dimension_numbers = #tpu.dot_dimension_numbers<[1], [1], [0], [0], [0, 0, 1, 0], [], []>} : vector<16x96xf32>, vector<8x96xf32>, vector<16x8xf32> -> vector<16x8xf32>
    "tpu.trace_stop"() : () -> ()
    %37 = vector.shape_cast %36 : vector<16x8xf32> to vector<2x8x8xf32>
    "tpu.trace_start"() <{level = 10 : i32, message = "bqd,bkd->bqk"}> : () -> ()
    %cst_21 = arith.constant dense<0.000000e+00> : vector<2x8x8xf32>
    %38 = tpu.matmul %33, %35, %cst_21 {dimension_numbers = #tpu.dot_dimension_numbers<[2], [2], [1], [1], [0, 0, 0, 1, 1, 1], [0], [0]>} : vector<2x8x8xf32>, vector<2x8x8xf32>, vector<2x8x8xf32> -> vector<2x8x8xf32>
    "tpu.trace_stop"() : () -> ()
    %cst_22 = arith.constant dense<0xFF800000> : vector<2x8xf32>
    %39 = vector.multi_reduction <maximumf>, %38, %cst_22 [2] : vector<2x8x8xf32> to vector<2x8xf32>
    %40 = vector.shape_cast %39 : vector<2x8xf32> to vector<2x8x1xf32>
    %41 = vector.broadcast %40 : vector<2x8x1xf32> to vector<2x8x8xf32>
    %42 = arith.subf %38, %41 : vector<2x8x8xf32>
    %43 = math.exp %42 : vector<2x8x8xf32>
    %cst_23 = arith.constant dense<0.000000e+00> : vector<2x8xf32>
    %44 = vector.multi_reduction <add>, %43, %cst_23 [2] : vector<2x8x8xf32> to vector<2x8xf32>
    %45 = vector.shape_cast %44 : vector<2x8xf32> to vector<2x8x1xf32>
    %46 = vector.broadcast %45 : vector<2x8x1xf32> to vector<2x8x8xf32>
    %47 = arith.divf %43, %46 : vector<2x8x8xf32>
    "tpu.trace_start"() <{level = 10 : i32, message = "bqk,bkd->bqd"}> : () -> ()
    %cst_24 = arith.constant dense<0.000000e+00> : vector<2x8x8xf32>
    %48 = tpu.matmul %47, %37, %cst_24 {dimension_numbers = #tpu.dot_dimension_numbers<[2], [1], [1], [2], [0, 0, 0, 1, 1, 2], [0], [0]>} : vector<2x8x8xf32>, vector<2x8x8xf32>, vector<2x8x8xf32> -> vector<2x8x8xf32>
    "tpu.trace_stop"() : () -> ()
    %49 = vector.shape_cast %48 : vector<2x8x8xf32> to vector<16x8xf32>
    %cst_25 = arith.constant dense<0.000000e+00> : vector<16x96xf32>
    %50 = tpu.matmul %49, %29, %cst_25 {dimension_numbers = #tpu.dot_dimension_numbers<[1], [0], [0], [1], [0, 0, 1, 1], [], []>} : vector<16x8xf32>, vector<8x96xf32>, vector<16x96xf32> -> vector<16x96xf32>
    %51 = arith.addf %28, %50 : vector<16x96xf32>
    %c16 = arith.constant 16 : index
    %c0_26 = arith.constant 0 : index
    %52 = vector.load %arg1[%c16, %c0_26] : memref<129x96xf32, #tpu.memory_space<vmem>>, vector<8x96xf32>
    %c48 = arith.constant 48 : index
    %c0_27 = arith.constant 0 : index
    %53 = vector.load %arg1[%c48, %c0_27] : memref<129x96xf32, #tpu.memory_space<vmem>>, vector<8x96xf32>
    %c80 = arith.constant 80 : index
    %c0_28 = arith.constant 0 : index
    %54 = vector.load %arg1[%c80, %c0_28] : memref<129x96xf32, #tpu.memory_space<vmem>>, vector<8x96xf32>
    "tpu.trace_start"() <{level = 10 : i32, message = "nd,jd->nj"}> : () -> ()
    %cst_29 = arith.constant dense<0.000000e+00> : vector<16x8xf32>
    %55 = tpu.matmul %3, %52, %cst_29 {dimension_numbers = #tpu.dot_dimension_numbers<[1], [1], [0], [0], [0, 0, 1, 0], [], []>} : vector<16x96xf32>, vector<8x96xf32>, vector<16x8xf32> -> vector<16x8xf32>
    "tpu.trace_stop"() : () -> ()
    %56 = vector.shape_cast %55 : vector<16x8xf32> to vector<2x8x8xf32>
    "tpu.trace_start"() <{level = 10 : i32, message = "nd,jd->nj"}> : () -> ()
    %cst_30 = arith.constant dense<0.000000e+00> : vector<16x8xf32>
    %57 = tpu.matmul %4, %53, %cst_30 {dimension_numbers = #tpu.dot_dimension_numbers<[1], [1], [0], [0], [0, 0, 1, 0], [], []>} : vector<16x96xf32>, vector<8x96xf32>, vector<16x8xf32> -> vector<16x8xf32>
    "tpu.trace_stop"() : () -> ()
    %58 = vector.shape_cast %57 : vector<16x8xf32> to vector<2x8x8xf32>
    "tpu.trace_start"() <{level = 10 : i32, message = "nd,jd->nj"}> : () -> ()
    %cst_31 = arith.constant dense<0.000000e+00> : vector<16x8xf32>
    %59 = tpu.matmul %4, %54, %cst_31 {dimension_numbers = #tpu.dot_dimension_numbers<[1], [1], [0], [0], [0, 0, 1, 0], [], []>} : vector<16x96xf32>, vector<8x96xf32>, vector<16x8xf32> -> vector<16x8xf32>
    "tpu.trace_stop"() : () -> ()
    %60 = vector.shape_cast %59 : vector<16x8xf32> to vector<2x8x8xf32>
    "tpu.trace_start"() <{level = 10 : i32, message = "bqd,bkd->bqk"}> : () -> ()
    %cst_32 = arith.constant dense<0.000000e+00> : vector<2x8x8xf32>
    %61 = tpu.matmul %56, %58, %cst_32 {dimension_numbers = #tpu.dot_dimension_numbers<[2], [2], [1], [1], [0, 0, 0, 1, 1, 1], [0], [0]>} : vector<2x8x8xf32>, vector<2x8x8xf32>, vector<2x8x8xf32> -> vector<2x8x8xf32>
    "tpu.trace_stop"() : () -> ()
    %cst_33 = arith.constant dense<0xFF800000> : vector<2x8xf32>
    %62 = vector.multi_reduction <maximumf>, %61, %cst_33 [2] : vector<2x8x8xf32> to vector<2x8xf32>
    %63 = vector.shape_cast %62 : vector<2x8xf32> to vector<2x8x1xf32>
    %64 = vector.broadcast %63 : vector<2x8x1xf32> to vector<2x8x8xf32>
    %65 = arith.subf %61, %64 : vector<2x8x8xf32>
    %66 = math.exp %65 : vector<2x8x8xf32>
    %cst_34 = arith.constant dense<0.000000e+00> : vector<2x8xf32>
    %67 = vector.multi_reduction <add>, %66, %cst_34 [2] : vector<2x8x8xf32> to vector<2x8xf32>
    %68 = vector.shape_cast %67 : vector<2x8xf32> to vector<2x8x1xf32>
    %69 = vector.broadcast %68 : vector<2x8x1xf32> to vector<2x8x8xf32>
    %70 = arith.divf %66, %69 : vector<2x8x8xf32>
    "tpu.trace_start"() <{level = 10 : i32, message = "bqk,bkd->bqd"}> : () -> ()
    %cst_35 = arith.constant dense<0.000000e+00> : vector<2x8x8xf32>
    %71 = tpu.matmul %70, %60, %cst_35 {dimension_numbers = #tpu.dot_dimension_numbers<[2], [1], [1], [2], [0, 0, 0, 1, 1, 2], [0], [0]>} : vector<2x8x8xf32>, vector<2x8x8xf32>, vector<2x8x8xf32> -> vector<2x8x8xf32>
    "tpu.trace_stop"() : () -> ()
    %72 = vector.shape_cast %71 : vector<2x8x8xf32> to vector<16x8xf32>
    %cst_36 = arith.constant dense<0.000000e+00> : vector<16x96xf32>
    %73 = tpu.matmul %72, %52, %cst_36 {dimension_numbers = #tpu.dot_dimension_numbers<[1], [0], [0], [1], [0, 0, 1, 1], [], []>} : vector<16x8xf32>, vector<8x96xf32>, vector<16x96xf32> -> vector<16x96xf32>
    %74 = arith.addf %51, %73 : vector<16x96xf32>
    %c24 = arith.constant 24 : index
    %c0_37 = arith.constant 0 : index
    %75 = vector.load %arg1[%c24, %c0_37] : memref<129x96xf32, #tpu.memory_space<vmem>>, vector<8x96xf32>
    %c56 = arith.constant 56 : index
    %c0_38 = arith.constant 0 : index
    %76 = vector.load %arg1[%c56, %c0_38] : memref<129x96xf32, #tpu.memory_space<vmem>>, vector<8x96xf32>
    %c88 = arith.constant 88 : index
    %c0_39 = arith.constant 0 : index
    %77 = vector.load %arg1[%c88, %c0_39] : memref<129x96xf32, #tpu.memory_space<vmem>>, vector<8x96xf32>
    "tpu.trace_start"() <{level = 10 : i32, message = "nd,jd->nj"}> : () -> ()
    %cst_40 = arith.constant dense<0.000000e+00> : vector<16x8xf32>
    %78 = tpu.matmul %3, %75, %cst_40 {dimension_numbers = #tpu.dot_dimension_numbers<[1], [1], [0], [0], [0, 0, 1, 0], [], []>} : vector<16x96xf32>, vector<8x96xf32>, vector<16x8xf32> -> vector<16x8xf32>
    "tpu.trace_stop"() : () -> ()
    %79 = vector.shape_cast %78 : vector<16x8xf32> to vector<2x8x8xf32>
    "tpu.trace_start"() <{level = 10 : i32, message = "nd,jd->nj"}> : () -> ()
    %cst_41 = arith.constant dense<0.000000e+00> : vector<16x8xf32>
    %80 = tpu.matmul %4, %76, %cst_41 {dimension_numbers = #tpu.dot_dimension_numbers<[1], [1], [0], [0], [0, 0, 1, 0], [], []>} : vector<16x96xf32>, vector<8x96xf32>, vector<16x8xf32> -> vector<16x8xf32>
    "tpu.trace_stop"() : () -> ()
    %81 = vector.shape_cast %80 : vector<16x8xf32> to vector<2x8x8xf32>
    "tpu.trace_start"() <{level = 10 : i32, message = "nd,jd->nj"}> : () -> ()
    %cst_42 = arith.constant dense<0.000000e+00> : vector<16x8xf32>
    %82 = tpu.matmul %4, %77, %cst_42 {dimension_numbers = #tpu.dot_dimension_numbers<[1], [1], [0], [0], [0, 0, 1, 0], [], []>} : vector<16x96xf32>, vector<8x96xf32>, vector<16x8xf32> -> vector<16x8xf32>
    "tpu.trace_stop"() : () -> ()
    %83 = vector.shape_cast %82 : vector<16x8xf32> to vector<2x8x8xf32>
    "tpu.trace_start"() <{level = 10 : i32, message = "bqd,bkd->bqk"}> : () -> ()
    %cst_43 = arith.constant dense<0.000000e+00> : vector<2x8x8xf32>
    %84 = tpu.matmul %79, %81, %cst_43 {dimension_numbers = #tpu.dot_dimension_numbers<[2], [2], [1], [1], [0, 0, 0, 1, 1, 1], [0], [0]>} : vector<2x8x8xf32>, vector<2x8x8xf32>, vector<2x8x8xf32> -> vector<2x8x8xf32>
    "tpu.trace_stop"() : () -> ()
    %cst_44 = arith.constant dense<0xFF800000> : vector<2x8xf32>
    %85 = vector.multi_reduction <maximumf>, %84, %cst_44 [2] : vector<2x8x8xf32> to vector<2x8xf32>
    %86 = vector.shape_cast %85 : vector<2x8xf32> to vector<2x8x1xf32>
    %87 = vector.broadcast %86 : vector<2x8x1xf32> to vector<2x8x8xf32>
    %88 = arith.subf %84, %87 : vector<2x8x8xf32>
    %89 = math.exp %88 : vector<2x8x8xf32>
    %cst_45 = arith.constant dense<0.000000e+00> : vector<2x8xf32>
    %90 = vector.multi_reduction <add>, %89, %cst_45 [2] : vector<2x8x8xf32> to vector<2x8xf32>
    %91 = vector.shape_cast %90 : vector<2x8xf32> to vector<2x8x1xf32>
    %92 = vector.broadcast %91 : vector<2x8x1xf32> to vector<2x8x8xf32>
    %93 = arith.divf %89, %92 : vector<2x8x8xf32>
    "tpu.trace_start"() <{level = 10 : i32, message = "bqk,bkd->bqd"}> : () -> ()
    %cst_46 = arith.constant dense<0.000000e+00> : vector<2x8x8xf32>
    %94 = tpu.matmul %93, %83, %cst_46 {dimension_numbers = #tpu.dot_dimension_numbers<[2], [1], [1], [2], [0, 0, 0, 1, 1, 2], [0], [0]>} : vector<2x8x8xf32>, vector<2x8x8xf32>, vector<2x8x8xf32> -> vector<2x8x8xf32>
    "tpu.trace_stop"() : () -> ()
    %95 = vector.shape_cast %94 : vector<2x8x8xf32> to vector<16x8xf32>
    %cst_47 = arith.constant dense<0.000000e+00> : vector<16x96xf32>
    %96 = tpu.matmul %95, %75, %cst_47 {dimension_numbers = #tpu.dot_dimension_numbers<[1], [0], [0], [1], [0, 0, 1, 1], [], []>} : vector<16x8xf32>, vector<8x96xf32>, vector<16x96xf32> -> vector<16x96xf32>
    %97 = arith.addf %74, %96 : vector<16x96xf32>
    %98 = vector.extract_strided_slice %0 {offsets = [0, 0], sizes = [16, 32], strides = [1, 1]} : vector<32x33xf32> to vector<16x32xf32>
    %99 = vector.extract_strided_slice %97 {offsets = [0, 0], sizes = [16, 32], strides = [1, 1]} : vector<16x96xf32> to vector<16x32xf32>
    %100 = arith.addf %99, %98 : vector<16x32xf32>
    %cst_48 = arith.constant 3.125000e-02 : f32
    %101 = vector.broadcast %cst_48 : f32 to vector<32x8xf32>
    %cst_49 = arith.constant dense<0.000000e+00> : vector<16x8xf32>
    %102 = tpu.matmul %100, %101, %cst_49 {dimension_numbers = #tpu.dot_dimension_numbers<[1], [0], [0], [1], [0, 0, 1, 1], [], []>} : vector<16x32xf32>, vector<32x8xf32>, vector<16x8xf32> -> vector<16x8xf32>
    %103 = vector.extract_strided_slice %102 {offsets = [0, 0], sizes = [16, 1], strides = [1, 1]} : vector<16x8xf32> to vector<16x1xf32>
    %104 = vector.broadcast %103 : vector<16x1xf32> to vector<16x32xf32>
    %105 = arith.subf %100, %104 : vector<16x32xf32>
    %106 = arith.mulf %105, %105 : vector<16x32xf32>
    %cst_50 = arith.constant dense<0.000000e+00> : vector<16x8xf32>
    %107 = tpu.matmul %106, %101, %cst_50 {dimension_numbers = #tpu.dot_dimension_numbers<[1], [0], [0], [1], [0, 0, 1, 1], [], []>} : vector<16x32xf32>, vector<32x8xf32>, vector<16x8xf32> -> vector<16x8xf32>
    %108 = vector.extract_strided_slice %107 {offsets = [0, 0], sizes = [16, 1], strides = [1, 1]} : vector<16x8xf32> to vector<16x1xf32>
    %c97 = arith.constant 97 : index
    %c0_51 = arith.constant 0 : index
    %109 = vector.load %arg2[%c97, %c0_51] : memref<100x64xf32, #tpu.memory_space<vmem>>, vector<1x32xf32>
    %c98 = arith.constant 98 : index
    %c0_52 = arith.constant 0 : index
    %110 = vector.load %arg2[%c98, %c0_52] : memref<100x64xf32, #tpu.memory_space<vmem>>, vector<1x32xf32>
    %cst_53 = arith.constant 9.99999997E-7 : f32
    %111 = vector.broadcast %cst_53 : f32 to vector<16x1xf32>
    %112 = arith.addf %108, %111 : vector<16x1xf32>
    %113 = math.rsqrt %112 : vector<16x1xf32>
    %114 = vector.broadcast %113 : vector<16x1xf32> to vector<16x32xf32>
    %115 = arith.mulf %105, %114 : vector<16x32xf32>
    %116 = vector.broadcast %109 : vector<1x32xf32> to vector<16x32xf32>
    %117 = arith.mulf %115, %116 : vector<16x32xf32>
    %118 = vector.broadcast %110 : vector<1x32xf32> to vector<16x32xf32>
    %119 = arith.addf %117, %118 : vector<16x32xf32>
    %c0_54 = arith.constant 0 : index
    %c0_55 = arith.constant 0 : index
    %120 = vector.load %arg2[%c0_54, %c0_55] : memref<100x64xf32, #tpu.memory_space<vmem>>, vector<32x64xf32>
    %c96_56 = arith.constant 96 : index
    %c0_57 = arith.constant 0 : index
    %121 = vector.load %arg2[%c96_56, %c0_57] : memref<100x64xf32, #tpu.memory_space<vmem>>, vector<1x64xf32>
    %cst_58 = arith.constant dense<0.000000e+00> : vector<16x64xf32>
    %122 = tpu.matmul %119, %120, %cst_58 {dimension_numbers = #tpu.dot_dimension_numbers<[1], [0], [0], [1], [0, 0, 1, 1], [], []>} : vector<16x32xf32>, vector<32x64xf32>, vector<16x64xf32> -> vector<16x64xf32>
    %123 = vector.broadcast %121 : vector<1x64xf32> to vector<16x64xf32>
    %124 = arith.addf %122, %123 : vector<16x64xf32>
    %cst_59 = arith.constant 0.000000e+00 : f32
    %125 = vector.broadcast %cst_59 : f32 to vector<16x64xf32>
    %126 = arith.maximumf %124, %125 : vector<16x64xf32>
    %c32_60 = arith.constant 32 : index
    %c0_61 = arith.constant 0 : index
    %127 = vector.load %arg2[%c32_60, %c0_61] : memref<100x64xf32, #tpu.memory_space<vmem>>, vector<64x64xf32>
    %cst_62 = arith.constant dense<0.000000e+00> : vector<16x64xf32>
    %128 = tpu.matmul %126, %127, %cst_62 {dimension_numbers = #tpu.dot_dimension_numbers<[1], [0], [0], [1], [0, 0, 1, 1], [], []>} : vector<16x64xf32>, vector<64x64xf32>, vector<16x64xf32> -> vector<16x64xf32>
    %c99 = arith.constant 99 : index
    %c0_63 = arith.constant 0 : index
    %129 = vector.load %arg2[%c99, %c0_63] : memref<100x64xf32, #tpu.memory_space<vmem>>, vector<1x32xf32>
    %130 = vector.extract_strided_slice %128 {offsets = [0, 0], sizes = [16, 32], strides = [1, 1]} : vector<16x64xf32> to vector<16x32xf32>
    %131 = vector.broadcast %129 : vector<1x32xf32> to vector<16x32xf32>
    %132 = arith.addf %130, %131 : vector<16x32xf32>
    %133 = arith.addf %132, %119 : vector<16x32xf32>
    %c0_64 = arith.constant 0 : index
    %c0_65 = arith.constant 0 : index
    %134 = vector.load %arg3[%c0_64, %c0_65] : memref<16x32xf32, #tpu.memory_space<vmem>>, vector<16x32xf32>
    tpu.vector_store %arg3[%c0_64, %c0_65], %133 {strides = array<i32>} : memref<16x32xf32, #tpu.memory_space<vmem>>, vector<16x32xf32>,
    return
  }
}

</mosaic_0001>

<llo_original>
// kernel: tpu_custom_call.1
$region0: #{tpu_custom_call.1}
  #allocation0 [shape = 'u32[]', space=smem, size = 0x4, offset = 0x4, fixed_abs, tag = 'smem constant byte address 0x4 - core index']
  #allocation1 [shape = 'u32[72,128]{1,0:T(1,128)}', space=vmem, size = 0x9000, scoped, tag = 'internal scratch']
  %s0 = inlined_call_operand.vmem [shape: f32[32,33], index: 0, kind: input, shape index: {}]
  %s1 = inlined_call_operand.vmem [shape: f32[129,96], index: 1, kind: input, shape index: {}]
  %s2 = inlined_call_operand.vmem [shape: f32[100,64], index: 2, kind: input, shape index: {}]
  %s3 = inlined_call_operand.hbm [shape: f32[16,32], index: 3, kind: output, shape index: {}]
  %s4 = sld [smem:[#allocation0]]
  $region22: #{tpu_custom_call.1} parent=0
    _
  %s6 = ssub.s32 1, %s4
  %s7 = scalar_select 0, %s6, %s4
  $region1: #{tpu_custom_call.1} parent=0
    #allocation2 [shape = 'u8[8192]{0}', space=vmem, size = 0x2000, scoped, tag = 'output window, operand 0, single buffered']
    #allocation3 [shape = 's32[1]{0}', space=sflag, size = 0x4, scoped, tag = 'scoped memory for tpu_custom_call.1']
    %8 = vsyncpa [#allocation3], 0
    // Predicated region
    $region2: #{tpu_custom_call.1} parent=1 // pred_check
      _
    $region3: #{tpu_custom_call.1} parent=1 // pred_check_branch
      %10 = sbr.rel (0) target = $region5
    $region4: #{tpu_custom_call.1} parent=1 // pred_region
      _
    $region5: #{tpu_custom_call.1} parent=1 // pred_fallthru
      _
    // Predicated region
    $region6: #{tpu_custom_call.1} parent=1 // pred_check
      _
    $region7: #{tpu_custom_call.1} parent=1 // pred_check_branch
      %12 = sbr.rel (0) target = $region9
    $region8: #{tpu_custom_call.1} parent=1 // pred_region
      _
    $region9: #{tpu_custom_call.1} parent=1 // pred_fallthru
      _
    // Predicated region
    $region10: #{tpu_custom_call.1} parent=1 // pred_check
      _
    $region11: #{tpu_custom_call.1} parent=1 // pred_check_branch
      %14 = sbr.rel (0) target = $region13
    $region12: #{tpu_custom_call.1} parent=1 // pred_region
      _
    $region13: #{tpu_custom_call.1} parent=1 // pred_fallthru
      _
    %v15 = vld [vmem:[%s0] sm:$0xff]
    %v16 = vld [vmem:[%s0 + $0x8] sm:$0xff]
    %v17 = vld [vmem:[%s0 + $0x10] sm:$0xff]
    %v18 = vld [vmem:[%s0 + $0x18] sm:$0xff]
    %v19 = vld [vmem:[%s1 + $0x60] sm:$0xff]
    %v20 = vld [vmem:[%s1 + $0x68] sm:$0xff]
    %v21 = vld [vmem:[%s1 + $0x70] sm:$0xff]
    %v22 = vld [vmem:[%s1 + $0x78] sm:$0xff]
    %v23 = vld [vmem:[%s1 + $0x80] sm:$0x1]
    %vm24 = vcmask 269312
    %v26 = vsel %vm24, %v15, 0
    %v29 = vsel %vm24, %v16, 0
    %v32 = vsel %vm24, %v17, 0
    %v35 = vsel %vm24, %v18, 0
    %vm37 = vcmask 1040384
    %v39 = vsel %vm37, %v23, 0
    %41 = vmatpush.msra.mxu0 0.0
    %42 = vmatpush.msra.mxu0 0.0
    %43 = vmatpush.msra.mxu0 0.0
    %44 = vmatpush.msra.mxu0 0.0
    %45 = vmatpush.msra.mxu0 0.0
    %46 = vmatpush.msra.mxu0 0.0
    %47 = vmatpush.msra.mxu0 0.0
    %48 = vmatpush.msra.mxu0 0.0
    %49 = vmatpush.msra.mxu0 0.0
    %50 = vmatpush.msra.mxu0 0.0
    %51 = vmatpush.msra.mxu0 0.0
    %52 = vmatpush.msra.mxu0 %v39
    %53 = vmatpush.msra.mxu0 %v22
    %54 = vmatpush.msra.mxu0 %v21
    %55 = vmatpush.msra.mxu0 %v20
    %56 = vmatpush.msra.mxu0 %v19
    %57 = vmatmul.f32.gmra.mxu0 %v26
    %v58 = vpop.f32.mrf.mxu0
    %v59 = vadd.f32 0.0, %v58
    %60 = vmatmul.f32.gmra.mxu0 %v29
    %v61 = vpop.f32.mrf.mxu0
    %v62 = vadd.f32 0.0, %v61
    %63 = vmatmul.f32.gmra.mxu0 %v32
    %v64 = vpop.f32.mrf.mxu0
    %v65 = vadd.f32 0.0, %v64
    %66 = vmatmul.f32.gmra.mxu0 %v35
    %v67 = vpop.f32.mrf.mxu0
    %v68 = vadd.f32 0.0, %v67
    %69 = vdwg.mxu0
    %v70 = vld [vmem:[%s1] sm:$0xff]
    %v71 = vld [vmem:[%s1 + $0x20] sm:$0xff]
    %v72 = vld [vmem:[%s1 + $0x40] sm:$0xff]
    %vm73 = vcmask 785408
    %v75 = vsel %vm73, %v59, 0
    %v78 = vsel %vm73, %v62, 0
    %v81 = vsel %vm73, %v70, 0
    %83 = vmatpush.xpose.msra.mxu0 0.0
    %84 = vmatpush.xpose.msra.mxu0 0.0
    %85 = vmatpush.xpose.msra.mxu0 0.0
    %86 = vmatpush.xpose.msra.mxu0 0.0
    %87 = vmatpush.xpose.msra.mxu0 0.0
    %88 = vmatpush.xpose.msra.mxu0 0.0
    %89 = vmatpush.xpose.msra.mxu0 0.0
    %90 = vmatpush.xpose.msra.mxu0 0.0
    %91 = vmatpush.xpose.msra.mxu0 0.0
    %92 = vmatpush.xpose.msra.mxu0 0.0
    %93 = vmatpush.xpose.msra.mxu0 0.0
    %94 = vmatpush.xpose.msra.mxu0 0.0
    %95 = vmatpush.xpose.msra.mxu0 0.0
    %96 = vmatpush.xpose.msra.mxu0 0.0
    %97 = vmatpush.xpose.msra.mxu0 0.0
    %98 = vmatpush.xpose.msra.mxu0 %v81
    %99 = vmatmul.f32.gmra.mxu0 %v75
    %v100 = vpop.f32.mrf.mxu0
    %v101 = vadd.f32 0.0, %v100
    %102 = vmatmul.f32.gmra.mxu0 %v78
    %v103 = vpop.f32.mrf.mxu0
    %v104 = vadd.f32 0.0, %v103
    %105 = vdwg.mxu0
    %v107 = vsel %vm73, %v65, 0
    %v110 = vsel %vm73, %v68, 0
    %v113 = vsel %vm73, %v71, 0
    %115 = vmatpush.xpose.msra.mxu0 0.0
    %116 = vmatpush.xpose.msra.mxu0 0.0
    %117 = vmatpush.xpose.msra.mxu0 0.0
    %118 = vmatpush.xpose.msra.mxu0 0.0
    %119 = vmatpush.xpose.msra.mxu0 0.0
    %120 = vmatpush.xpose.msra.mxu0 0.0
    %121 = vmatpush.xpose.msra.mxu0 0.0
    %122 = vmatpush.xpose.msra.mxu0 0.0
    %123 = vmatpush.xpose.msra.mxu0 0.0
    %124 = vmatpush.xpose.msra.mxu0 0.0
    %125 = vmatpush.xpose.msra.mxu0 0.0
    %126 = vmatpush.xpose.msra.mxu0 0.0
    %127 = vmatpush.xpose.msra.mxu0 0.0
    %128 = vmatpush.xpose.msra.mxu0 0.0
    %129 = vmatpush.xpose.msra.mxu0 0.0
    %130 = vmatpush.xpose.msra.mxu0 %v113
    %131 = vmatmul.f32.gmra.mxu0 %v107
    %v132 = vpop.f32.mrf.mxu0
    %v133 = vadd.f32 0.0, %v132
    %134 = vmatmul.f32.gmra.mxu0 %v110
    %v135 = vpop.f32.mrf.mxu0
    %v136 = vadd.f32 0.0, %v135
    %137 = vdwg.mxu0
    %v139 = vsel %vm73, %v72, 0
    %141 = vmatpush.xpose.msra.mxu0 0.0
    %142 = vmatpush.xpose.msra.mxu0 0.0
    %143 = vmatpush.xpose.msra.mxu0 0.0
    %144 = vmatpush.xpose.msra.mxu0 0.0
    %145 = vmatpush.xpose.msra.mxu0 0.0
    %146 = vmatpush.xpose.msra.mxu0 0.0
    %147 = vmatpush.xpose.msra.mxu0 0.0
    %148 = vmatpush.xpose.msra.mxu0 0.0
    %149 = vmatpush.xpose.msra.mxu0 0.0
    %150 = vmatpush.xpose.msra.mxu0 0.0
    %151 = vmatpush.xpose.msra.mxu0 0.0
    %152 = vmatpush.xpose.msra.mxu0 0.0
    %153 = vmatpush.xpose.msra.mxu0 0.0
    %154 = vmatpush.xpose.msra.mxu0 0.0
    %155 = vmatpush.xpose.msra.mxu0 0.0
    %156 = vmatpush.xpose.msra.mxu0 %v139
    %157 = vmatmul.f32.gmra.mxu0 %v107
    %v158 = vpop.f32.mrf.mxu0
    %v159 = vadd.f32 0.0, %v158
    %160 = vmatmul.f32.gmra.mxu0 %v110
    %v161 = vpop.f32.mrf.mxu0
    %v162 = vadd.f32 0.0, %v161
    %163 = vdwg.mxu0
    %vm164 = vcmask 64512
    %v166 = vsel %vm164, %v101, 0
    %v169 = vsel %vm164, %v133, 0
    %171 = vmatpush.xpose.msra.mxu0 0.0
    %172 = vmatpush.xpose.msra.mxu0 0.0
    %173 = vmatpush.xpose.msra.mxu0 0.0
    %174 = vmatpush.xpose.msra.mxu0 0.0
    %175 = vmatpush.xpose.msra.mxu0 0.0
    %176 = vmatpush.xpose.msra.mxu0 0.0
    %177 = vmatpush.xpose.msra.mxu0 0.0
    %178 = vmatpush.xpose.msra.mxu0 0.0
    %179 = vmatpush.xpose.msra.mxu0 0.0
    %180 = vmatpush.xpose.msra.mxu0 0.0
    %181 = vmatpush.xpose.msra.mxu0 0.0
    %182 = vmatpush.xpose.msra.mxu0 0.0
    %183 = vmatpush.xpose.msra.mxu0 0.0
    %184 = vmatpush.xpose.msra.mxu0 0.0
    %185 = vmatpush.xpose.msra.mxu0 0.0
    %186 = vmatpush.xpose.msra.mxu0 %v169
    %187 = vmatmul.f32.gmra.mxu0 %v166
    %v188 = vpop.f32.mrf.mxu0
    %v189 = vadd.f32 0.0, %v188
    %190 = vdwg.mxu0
    %v192 = vsel %vm164, %v104, 0
    %v195 = vsel %vm164, %v136, 0
    %197 = vmatpush.xpose.msra.mxu0 0.0
    %198 = vmatpush.xpose.msra.mxu0 0.0
    %199 = vmatpush.xpose.msra.mxu0 0.0
    %200 = vmatpush.xpose.msra.mxu0 0.0
    %201 = vmatpush.xpose.msra.mxu0 0.0
    %202 = vmatpush.xpose.msra.mxu0 0.0
    %203 = vmatpush.xpose.msra.mxu0 0.0
    %204 = vmatpush.xpose.msra.mxu0 0.0
    %205 = vmatpush.xpose.msra.mxu0 0.0
    %206 = vmatpush.xpose.msra.mxu0 0.0
    %207 = vmatpush.xpose.msra.mxu0 0.0
    %208 = vmatpush.xpose.msra.mxu0 0.0
    %209 = vmatpush.xpose.msra.mxu0 0.0
    %210 = vmatpush.xpose.msra.mxu0 0.0
    %211 = vmatpush.xpose.msra.mxu0 0.0
    %212 = vmatpush.xpose.msra.mxu0 %v195
    %213 = vmatmul.f32.gmra.mxu0 %v192
    %v214 = vpop.f32.mrf.mxu0
    %v215 = vadd.f32 0.0, %v214
    %216 = vdwg.mxu0
    %v217 = vsel %vm164, %v189, -inf
    %218 = vmax.xlane.f32.xlu0 %v217
    %v219 = vpop.xlane.xlu0 %218
    %v220 = vsel %vm164, %v215, -inf
    %221 = vmax.xlane.f32.xlu0 %v220
    %v222 = vpop.xlane.xlu0 %221
    %v223 = vsub.f32 %v189, %v219
    %v224 = vsub.f32 %v215, %v222
    %v225 = vmul.f32 %v223, 1.442695
    %v226 = vpow.pop %v225
    %v227 = vmul.f32 %v224, 1.442695
    %v228 = vpow.pop %v227
    %v229 = vsel %vm164, %v226, 0.0
    %230 = vadd.xlane.f32.xlu0 %v229
    %v231 = vpop.xlane.xlu0 %230
    %v232 = vsel %vm164, %v228, 0.0
    %233 = vadd.xlane.f32.xlu0 %v232
    %v234 = vpop.xlane.xlu0 %233
    %v235 = vrcp.pop %v231
    %v236 = vmul.f32 %v231, %v235
    %v237 = vsub.f32 1.0, %v236
    %v238 = vmul.f32 %v235, %v237
    %v239 = vadd.f32 %v235, %v238
    %vm240 = vweird.f32 %v231
    %vm241 = vweird.f32 %v235
    %vm242 = vmor %vm240, %vm241
    %v243 = vsel %vm242, %v235, %v239
    %v244 = vand.u32 2147483647, %v231
    %vm245 = vcmp.eq.f32.partialorder %v244, 8.507059e+37
    %v246 = vand.u32 %v231, 2147483648
    %v247 = vor.u32 1.1754944e-38, %v246
    %v248 = vsel %vm245, %v247, %v243
    %v249 = vmul.f32 %v226, %v248
    %v250 = vrcp.pop %v234
    %v251 = vmul.f32 %v234, %v250
    %v252 = vsub.f32 1.0, %v251
    %v253 = vmul.f32 %v250, %v252
    %v254 = vadd.f32 %v250, %v253
    %vm255 = vweird.f32 %v234
    %vm256 = vweird.f32 %v250
    %vm257 = vmor %vm255, %vm256
    %v258 = vsel %vm257, %v250, %v254
    %v259 = vand.u32 2147483647, %v234
    %vm260 = vcmp.eq.f32.partialorder %v259, 8.507059e+37
    %v261 = vand.u32 %v234, 2147483648
    %v262 = vor.u32 1.1754944e-38, %v261
    %v263 = vsel %vm260, %v262, %v258
    %v264 = vmul.f32 %v228, %v263
    %v266 = vsel %vm164, %v249, 0
    %268 = vmatpush.msra.mxu0 0.0
    %269 = vmatpush.msra.mxu0 0.0
    %270 = vmatpush.msra.mxu0 0.0
    %271 = vmatpush.msra.mxu0 0.0
    %272 = vmatpush.msra.mxu0 0.0
    %273 = vmatpush.msra.mxu0 0.0
    %274 = vmatpush.msra.mxu0 0.0
    %275 = vmatpush.msra.mxu0 0.0
    %276 = vmatpush.msra.mxu0 0.0
    %277 = vmatpush.msra.mxu0 0.0
    %278 = vmatpush.msra.mxu0 0.0
    %279 = vmatpush.msra.mxu0 0.0
    %280 = vmatpush.msra.mxu0 0.0
    %281 = vmatpush.msra.mxu0 0.0
    %282 = vmatpush.msra.mxu0 0.0
    %283 = vmatpush.msra.mxu0 %v159
    %284 = vmatmul.f32.gmra.mxu0 %v266
    %v285 = vpop.f32.mrf.mxu0
    %v286 = vadd.f32 0.0, %v285
    %287 = vdwg.mxu0
    %v289 = vsel %vm164, %v264, 0
    %291 = vmatpush.msra.mxu0 0.0
    %292 = vmatpush.msra.mxu0 0.0
    %293 = vmatpush.msra.mxu0 0.0
    %294 = vmatpush.msra.mxu0 0.0
    %295 = vmatpush.msra.mxu0 0.0
    %296 = vmatpush.msra.mxu0 0.0
    %297 = vmatpush.msra.mxu0 0.0
    %298 = vmatpush.msra.mxu0 0.0
    %299 = vmatpush.msra.mxu0 0.0
    %300 = vmatpush.msra.mxu0 0.0
    %301 = vmatpush.msra.mxu0 0.0
    %302 = vmatpush.msra.mxu0 0.0
    %303 = vmatpush.msra.mxu0 0.0
    %304 = vmatpush.msra.mxu0 0.0
    %305 = vmatpush.msra.mxu0 0.0
    %306 = vmatpush.msra.mxu0 %v162
    %307 = vmatmul.f32.gmra.mxu0 %v289
    %v308 = vpop.f32.mrf.mxu0
    %v309 = vadd.f32 0.0, %v308
    %310 = vdwg.mxu0
    %v311 = vld [vmem:[%s1 + $0x8] sm:$0xff]
    %v312 = vld [vmem:[%s1 + $0x28] sm:$0xff]
    %v313 = vld [vmem:[%s1 + $0x48] sm:$0xff]
    %v315 = vsel %vm73, %v311, 0
    %317 = vmatpush.xpose.msra.mxu0 0.0
    %318 = vmatpush.xpose.msra.mxu0 0.0
    %319 = vmatpush.xpose.msra.mxu0 0.0
    %320 = vmatpush.xpose.msra.mxu0 0.0
    %321 = vmatpush.xpose.msra.mxu0 0.0
    %322 = vmatpush.xpose.msra.mxu0 0.0
    %323 = vmatpush.xpose.msra.mxu0 0.0
    %324 = vmatpush.xpose.msra.mxu0 0.0
    %325 = vmatpush.xpose.msra.mxu0 0.0
    %326 = vmatpush.xpose.msra.mxu0 0.0
    %327 = vmatpush.xpose.msra.mxu0 0.0
    %328 = vmatpush.xpose.msra.mxu0 0.0
    %329 = vmatpush.xpose.msra.mxu0 0.0
    %330 = vmatpush.xpose.msra.mxu0 0.0
    %331 = vmatpush.xpose.msra.mxu0 0.0
    %332 = vmatpush.xpose.msra.mxu0 %v315
    %333 = vmatmul.f32.gmra.mxu0 %v75
    %v334 = vpop.f32.mrf.mxu0
    %v335 = vadd.f32 0.0, %v334
    %336 = vmatmul.f32.gmra.mxu0 %v78
    %v337 = vpop.f32.mrf.mxu0
    %v338 = vadd.f32 0.0, %v337
    %339 = vdwg.mxu0
    %v341 = vsel %vm73, %v312, 0
    %343 = vmatpush.xpose.msra.mxu0 0.0
    %344 = vmatpush.xpose.msra.mxu0 0.0
    %345 = vmatpush.xpose.msra.mxu0 0.0
    %346 = vmatpush.xpose.msra.mxu0 0.0
    %347 = vmatpush.xpose.msra.mxu0 0.0
    %348 = vmatpush.xpose.msra.mxu0 0.0
    %349 = vmatpush.xpose.msra.mxu0 0.0
    %350 = vmatpush.xpose.msra.mxu0 0.0
    %351 = vmatpush.xpose.msra.mxu0 0.0
    %352 = vmatpush.xpose.msra.mxu0 0.0
    %353 = vmatpush.xpose.msra.mxu0 0.0
    %354 = vmatpush.xpose.msra.mxu0 0.0
    %355 = vmatpush.xpose.msra.mxu0 0.0
    %356 = vmatpush.xpose.msra.mxu0 0.0
    %357 = vmatpush.xpose.msra.mxu0 0.0
    %358 = vmatpush.xpose.msra.mxu0 %v341
    %359 = vmatmul.f32.gmra.mxu0 %v107
    %v360 = vpop.f32.mrf.mxu0
    %v361 = vadd.f32 0.0, %v360
    %362 = vmatmul.f32.gmra.mxu0 %v110
    %v363 = vpop.f32.mrf.mxu0
    %v364 = vadd.f32 0.0, %v363
    %365 = vdwg.mxu0
    %v367 = vsel %vm73, %v313, 0
    %369 = vmatpush.xpose.msra.mxu0 0.0
    %370 = vmatpush.xpose.msra.mxu0 0.0
    %371 = vmatpush.xpose.msra.mxu0 0.0
    %372 = vmatpush.xpose.msra.mxu0 0.0
    %373 = vmatpush.xpose.msra.mxu0 0.0
    %374 = vmatpush.xpose.msra.mxu0 0.0
    %375 = vmatpush.xpose.msra.mxu0 0.0
    %376 = vmatpush.xpose.msra.mxu0 0.0
    %377 = vmatpush.xpose.msra.mxu0 0.0
    %378 = vmatpush.xpose.msra.mxu0 0.0
    %379 = vmatpush.xpose.msra.mxu0 0.0
    %380 = vmatpush.xpose.msra.mxu0 0.0
    %381 = vmatpush.xpose.msra.mxu0 0.0
    %382 = vmatpush.xpose.msra.mxu0 0.0
    %383 = vmatpush.xpose.msra.mxu0 0.0
    %384 = vmatpush.xpose.msra.mxu0 %v367
    %385 = vmatmul.f32.gmra.mxu0 %v107
    %v386 = vpop.f32.mrf.mxu0
    %v387 = vadd.f32 0.0, %v386
    %388 = vmatmul.f32.gmra.mxu0 %v110
    %v389 = vpop.f32.mrf.mxu0
    %v390 = vadd.f32 0.0, %v389
    %391 = vdwg.mxu0
    %v393 = vsel %vm164, %v335, 0
    %v396 = vsel %vm164, %v361, 0
    %398 = vmatpush.xpose.msra.mxu0 0.0
    %399 = vmatpush.xpose.msra.mxu0 0.0
    %400 = vmatpush.xpose.msra.mxu0 0.0
    %401 = vmatpush.xpose.msra.mxu0 0.0
    %402 = vmatpush.xpose.msra.mxu0 0.0
    %403 = vmatpush.xpose.msra.mxu0 0.0
    %404 = vmatpush.xpose.msra.mxu0 0.0
    %405 = vmatpush.xpose.msra.mxu0 0.0
    %406 = vmatpush.xpose.msra.mxu0 0.0
    %407 = vmatpush.xpose.msra.mxu0 0.0
    %408 = vmatpush.xpose.msra.mxu0 0.0
    %409 = vmatpush.xpose.msra.mxu0 0.0
    %410 = vmatpush.xpose.msra.mxu0 0.0
    %411 = vmatpush.xpose.msra.mxu0 0.0
    %412 = vmatpush.xpose.msra.mxu0 0.0
    %413 = vmatpush.xpose.msra.mxu0 %v396
    %414 = vmatmul.f32.gmra.mxu0 %v393
    %v415 = vpop.f32.mrf.mxu0
    %v416 = vadd.f32 0.0, %v415
    %417 = vdwg.mxu0
    %v419 = vsel %vm164, %v338, 0
    %v422 = vsel %vm164, %v364, 0
    %424 = vmatpush.xpose.msra.mxu0 0.0
    %425 = vmatpush.xpose.msra.mxu0 0.0
    %426 = vmatpush.xpose.msra.mxu0 0.0
    %427 = vmatpush.xpose.msra.mxu0 0.0
    %428 = vmatpush.xpose.msra.mxu0 0.0
    %429 = vmatpush.xpose.msra.mxu0 0.0
    %430 = vmatpush.xpose.msra.mxu0 0.0
    %431 = vmatpush.xpose.msra.mxu0 0.0
    %432 = vmatpush.xpose.msra.mxu0 0.0
    %433 = vmatpush.xpose.msra.mxu0 0.0
    %434 = vmatpush.xpose.msra.mxu0 0.0
    %435 = vmatpush.xpose.msra.mxu0 0.0
    %436 = vmatpush.xpose.msra.mxu0 0.0
    %437 = vmatpush.xpose.msra.mxu0 0.0
    %438 = vmatpush.xpose.msra.mxu0 0.0
    %439 = vmatpush.xpose.msra.mxu0 %v422
    %440 = vmatmul.f32.gmra.mxu0 %v419
    %v441 = vpop.f32.mrf.mxu0
    %v442 = vadd.f32 0.0, %v441
    %443 = vdwg.mxu0
    %v444 = vsel %vm164, %v416, -inf
    %445 = vmax.xlane.f32.xlu0 %v444
    %v446 = vpop.xlane.xlu0 %445
    %v447 = vsel %vm164, %v442, -inf
    %448 = vmax.xlane.f32.xlu0 %v447
    %v449 = vpop.xlane.xlu0 %448
    %v450 = vsub.f32 %v416, %v446
    %v451 = vsub.f32 %v442, %v449
    %v452 = vmul.f32 %v450, 1.442695
    %v453 = vpow.pop %v452
    %v454 = vmul.f32 %v451, 1.442695
    %v455 = vpow.pop %v454
    %v456 = vsel %vm164, %v453, 0.0
    %457 = vadd.xlane.f32.xlu0 %v456
    %v458 = vpop.xlane.xlu0 %457
    %v459 = vsel %vm164, %v455, 0.0
    %460 = vadd.xlane.f32.xlu0 %v459
    %v461 = vpop.xlane.xlu0 %460
    %v462 = vrcp.pop %v458
    %v463 = vmul.f32 %v458, %v462
    %v464 = vsub.f32 1.0, %v463
    %v465 = vmul.f32 %v462, %v464
    %v466 = vadd.f32 %v462, %v465
    %vm467 = vweird.f32 %v458
    %vm468 = vweird.f32 %v462
    %vm469 = vmor %vm467, %vm468
    %v470 = vsel %vm469, %v462, %v466
    %v471 = vand.u32 2147483647, %v458
    %vm472 = vcmp.eq.f32.partialorder %v471, 8.507059e+37
    %v473 = vand.u32 %v458, 2147483648
    %v474 = vor.u32 1.1754944e-38, %v473
    %v475 = vsel %vm472, %v474, %v470
    %v476 = vmul.f32 %v453, %v475
    %v477 = vrcp.pop %v461
    %v478 = vmul.f32 %v461, %v477
    %v479 = vsub.f32 1.0, %v478
    %v480 = vmul.f32 %v477, %v479
    %v481 = vadd.f32 %v477, %v480
    %vm482 = vweird.f32 %v461
    %vm483 = vweird.f32 %v477
    %vm484 = vmor %vm482, %vm483
    %v485 = vsel %vm484, %v477, %v481
    %v486 = vand.u32 2147483647, %v461
    %vm487 = vcmp.eq.f32.partialorder %v486, 8.507059e+37
    %v488 = vand.u32 %v461, 2147483648
    %v489 = vor.u32 1.1754944e-38, %v488
    %v490 = vsel %vm487, %v489, %v485
    %v491 = vmul.f32 %v455, %v490
    %v493 = vsel %vm164, %v476, 0
    %495 = vmatpush.msra.mxu0 0.0
    %496 = vmatpush.msra.mxu0 0.0
    %497 = vmatpush.msra.mxu0 0.0
    %498 = vmatpush.msra.mxu0 0.0
    %499 = vmatpush.msra.mxu0 0.0
    %500 = vmatpush.msra.mxu0 0.0
    %501 = vmatpush.msra.mxu0 0.0
    %502 = vmatpush.msra.mxu0 0.0
    %503 = vmatpush.msra.mxu0 0.0
    %504 = vmatpush.msra.mxu0 0.0
    %505 = vmatpush.msra.mxu0 0.0
    %506 = vmatpush.msra.mxu0 0.0
    %507 = vmatpush.msra.mxu0 0.0
    %508 = vmatpush.msra.mxu0 0.0
    %509 = vmatpush.msra.mxu0 0.0
    %510 = vmatpush.msra.mxu0 %v387
    %511 = vmatmul.f32.gmra.mxu0 %v493
    %v512 = vpop.f32.mrf.mxu0
    %v513 = vadd.f32 0.0, %v512
    %514 = vdwg.mxu0
    %v516 = vsel %vm164, %v491, 0
    %518 = vmatpush.msra.mxu0 0.0
    %519 = vmatpush.msra.mxu0 0.0
    %520 = vmatpush.msra.mxu0 0.0
    %521 = vmatpush.msra.mxu0 0.0
    %522 = vmatpush.msra.mxu0 0.0
    %523 = vmatpush.msra.mxu0 0.0
    %524 = vmatpush.msra.mxu0 0.0
    %525 = vmatpush.msra.mxu0 0.0
    %526 = vmatpush.msra.mxu0 0.0
    %527 = vmatpush.msra.mxu0 0.0
    %528 = vmatpush.msra.mxu0 0.0
    %529 = vmatpush.msra.mxu0 0.0
    %530 = vmatpush.msra.mxu0 0.0
    %531 = vmatpush.msra.mxu0 0.0
    %532 = vmatpush.msra.mxu0 0.0
    %533 = vmatpush.msra.mxu0 %v390
    %534 = vmatmul.f32.gmra.mxu0 %v516
    %v535 = vpop.f32.mrf.mxu0
    %v536 = vadd.f32 0.0, %v535
    %537 = vdwg.mxu0
    %v539 = vsel %vm164, %v513, 0
    %v542 = vsel %vm164, %v536, 0
    %544 = vmatpush.msra.mxu0 0.0
    %545 = vmatpush.msra.mxu0 0.0
    %546 = vmatpush.msra.mxu0 0.0
    %547 = vmatpush.msra.mxu0 0.0
    %548 = vmatpush.msra.mxu0 0.0
    %549 = vmatpush.msra.mxu0 0.0
    %550 = vmatpush.msra.mxu0 0.0
    %551 = vmatpush.msra.mxu0 0.0
    %552 = vmatpush.msra.mxu0 0.0
    %553 = vmatpush.msra.mxu0 0.0
    %554 = vmatpush.msra.mxu0 0.0
    %555 = vmatpush.msra.mxu0 0.0
    %556 = vmatpush.msra.mxu0 0.0
    %557 = vmatpush.msra.mxu0 0.0
    %558 = vmatpush.msra.mxu0 0.0
    %559 = vmatpush.msra.mxu0 %v311
    %560 = vmatmul.f32.gmra.mxu0 %v539
    %v561 = vpop.f32.mrf.mxu0
    %v562 = vadd.f32 0.0, %v561
    %563 = vmatmul.f32.gmra.mxu0 %v542
    %v564 = vpop.f32.mrf.mxu0
    %v565 = vadd.f32 0.0, %v564
    %566 = vdwg.mxu0
    %v568 = vsel %vm164, %v286, 0
    %v571 = vsel %vm164, %v309, 0
    %573 = vmatpush.msra.mxu0 0.0
    %574 = vmatpush.msra.mxu0 0.0
    %575 = vmatpush.msra.mxu0 0.0
    %576 = vmatpush.msra.mxu0 0.0
    %577 = vmatpush.msra.mxu0 0.0
    %578 = vmatpush.msra.mxu0 0.0
    %579 = vmatpush.msra.mxu0 0.0
    %580 = vmatpush.msra.mxu0 0.0
    %581 = vmatpush.msra.mxu0 0.0
    %582 = vmatpush.msra.mxu0 0.0
    %583 = vmatpush.msra.mxu0 0.0
    %584 = vmatpush.msra.mxu0 0.0
    %585 = vmatpush.msra.mxu0 0.0
    %586 = vmatpush.msra.mxu0 0.0
    %587 = vmatpush.msra.mxu0 0.0
    %588 = vmatpush.msra.mxu0 %v70
    %589 = vmatmul.f32.gmra.mxu0 %v568
    %v590 = vpop.f32.mrf.mxu0
    %v591 = vadd.f32 %v562, %v590
    %592 = vmatmul.f32.gmra.mxu0 %v571
    %v593 = vpop.f32.mrf.mxu0
    %v594 = vadd.f32 %v565, %v593
    %595 = vdwg.mxu0
    %v596 = vld [vmem:[%s1 + $0x10] sm:$0xff]
    %v597 = vld [vmem:[%s1 + $0x30] sm:$0xff]
    %v598 = vld [vmem:[%s1 + $0x50] sm:$0xff]
    %v600 = vsel %vm73, %v596, 0
    %602 = vmatpush.xpose.msra.mxu0 0.0
    %603 = vmatpush.xpose.msra.mxu0 0.0
    %604 = vmatpush.xpose.msra.mxu0 0.0
    %605 = vmatpush.xpose.msra.mxu0 0.0
    %606 = vmatpush.xpose.msra.mxu0 0.0
    %607 = vmatpush.xpose.msra.mxu0 0.0
    %608 = vmatpush.xpose.msra.mxu0 0.0
    %609 = vmatpush.xpose.msra.mxu0 0.0
    %610 = vmatpush.xpose.msra.mxu0 0.0
    %611 = vmatpush.xpose.msra.mxu0 0.0
    %612 = vmatpush.xpose.msra.mxu0 0.0
    %613 = vmatpush.xpose.msra.mxu0 0.0
    %614 = vmatpush.xpose.msra.mxu0 0.0
    %615 = vmatpush.xpose.msra.mxu0 0.0
    %616 = vmatpush.xpose.msra.mxu0 0.0
    %617 = vmatpush.xpose.msra.mxu0 %v600
    %618 = vmatmul.f32.gmra.mxu0 %v75
    %v619 = vpop.f32.mrf.mxu0
    %v620 = vadd.f32 0.0, %v619
    %621 = vmatmul.f32.gmra.mxu0 %v78
    %v622 = vpop.f32.mrf.mxu0
    %v623 = vadd.f32 0.0, %v622
    %624 = vdwg.mxu0
    %v626 = vsel %vm73, %v597, 0
    %628 = vmatpush.xpose.msra.mxu0 0.0
    %629 = vmatpush.xpose.msra.mxu0 0.0
    %630 = vmatpush.xpose.msra.mxu0 0.0
    %631 = vmatpush.xpose.msra.mxu0 0.0
    %632 = vmatpush.xpose.msra.mxu0 0.0
    %633 = vmatpush.xpose.msra.mxu0 0.0
    %634 = vmatpush.xpose.msra.mxu0 0.0
    %635 = vmatpush.xpose.msra.mxu0 0.0
    %636 = vmatpush.xpose.msra.mxu0 0.0
    %637 = vmatpush.xpose.msra.mxu0 0.0
    %638 = vmatpush.xpose.msra.mxu0 0.0
    %639 = vmatpush.xpose.msra.mxu0 0.0
    %640 = vmatpush.xpose.msra.mxu0 0.0
    %641 = vmatpush.xpose.msra.mxu0 0.0
    %642 = vmatpush.xpose.msra.mxu0 0.0
    %643 = vmatpush.xpose.msra.mxu0 %v626
    %644 = vmatmul.f32.gmra.mxu0 %v107
    %v645 = vpop.f32.mrf.mxu0
    %v646 = vadd.f32 0.0, %v645
    %647 = vmatmul.f32.gmra.mxu0 %v110
    %v648 = vpop.f32.mrf.mxu0
    %v649 = vadd.f32 0.0, %v648
    %650 = vdwg.mxu0
    %v652 = vsel %vm73, %v598, 0
    %654 = vmatpush.xpose.msra.mxu0 0.0
    %655 = vmatpush.xpose.msra.mxu0 0.0
    %656 = vmatpush.xpose.msra.mxu0 0.0
    %657 = vmatpush.xpose.msra.mxu0 0.0
    %658 = vmatpush.xpose.msra.mxu0 0.0
    %659 = vmatpush.xpose.msra.mxu0 0.0
    %660 = vmatpush.xpose.msra.mxu0 0.0
    %661 = vmatpush.xpose.msra.mxu0 0.0
    %662 = vmatpush.xpose.msra.mxu0 0.0
    %663 = vmatpush.xpose.msra.mxu0 0.0
    %664 = vmatpush.xpose.msra.mxu0 0.0
    %665 = vmatpush.xpose.msra.mxu0 0.0
    %666 = vmatpush.xpose.msra.mxu0 0.0
    %667 = vmatpush.xpose.msra.mxu0 0.0
    %668 = vmatpush.xpose.msra.mxu0 0.0
    %669 = vmatpush.xpose.msra.mxu0 %v652
    %670 = vmatmul.f32.gmra.mxu0 %v107
    %v671 = vpop.f32.mrf.mxu0
    %v672 = vadd.f32 0.0, %v671
    %673 = vmatmul.f32.gmra.mxu0 %v110
    %v674 = vpop.f32.mrf.mxu0
    %v675 = vadd.f32 0.0, %v674
    %676 = vdwg.mxu0
    %v678 = vsel %vm164, %v620, 0
    %v681 = vsel %vm164, %v646, 0
    %683 = vmatpush.xpose.msra.mxu0 0.0
    %684 = vmatpush.xpose.msra.mxu0 0.0
    %685 = vmatpush.xpose.msra.mxu0 0.0
    %686 = vmatpush.xpose.msra.mxu0 0.0
    %687 = vmatpush.xpose.msra.mxu0 0.0
    %688 = vmatpush.xpose.msra.mxu0 0.0
    %689 = vmatpush.xpose.msra.mxu0 0.0
    %690 = vmatpush.xpose.msra.mxu0 0.0
    %691 = vmatpush.xpose.msra.mxu0 0.0
    %692 = vmatpush.xpose.msra.mxu0 0.0
    %693 = vmatpush.xpose.msra.mxu0 0.0
    %694 = vmatpush.xpose.msra.mxu0 0.0
    %695 = vmatpush.xpose.msra.mxu0 0.0
    %696 = vmatpush.xpose.msra.mxu0 0.0
    %697 = vmatpush.xpose.msra.mxu0 0.0
    %698 = vmatpush.xpose.msra.mxu0 %v681
    %699 = vmatmul.f32.gmra.mxu0 %v678
    %v700 = vpop.f32.mrf.mxu0
    %v701 = vadd.f32 0.0, %v700
    %702 = vdwg.mxu0
    %v704 = vsel %vm164, %v623, 0
    %v707 = vsel %vm164, %v649, 0
    %709 = vmatpush.xpose.msra.mxu0 0.0
    %710 = vmatpush.xpose.msra.mxu0 0.0
    %711 = vmatpush.xpose.msra.mxu0 0.0
    %712 = vmatpush.xpose.msra.mxu0 0.0
    %713 = vmatpush.xpose.msra.mxu0 0.0
    %714 = vmatpush.xpose.msra.mxu0 0.0
    %715 = vmatpush.xpose.msra.mxu0 0.0
    %716 = vmatpush.xpose.msra.mxu0 0.0
    %717 = vmatpush.xpose.msra.mxu0 0.0
    %718 = vmatpush.xpose.msra.mxu0 0.0
    %719 = vmatpush.xpose.msra.mxu0 0.0
    %720 = vmatpush.xpose.msra.mxu0 0.0
    %721 = vmatpush.xpose.msra.mxu0 0.0
    %722 = vmatpush.xpose.msra.mxu0 0.0
    %723 = vmatpush.xpose.msra.mxu0 0.0
    %724 = vmatpush.xpose.msra.mxu0 %v707
    %725 = vmatmul.f32.gmra.mxu0 %v704
    %v726 = vpop.f32.mrf.mxu0
    %v727 = vadd.f32 0.0, %v726
    %728 = vdwg.mxu0
    %v729 = vsel %vm164, %v701, -inf
    %730 = vmax.xlane.f32.xlu0 %v729
    %v731 = vpop.xlane.xlu0 %730
    %v732 = vsel %vm164, %v727, -inf
    %733 = vmax.xlane.f32.xlu0 %v732
    %v734 = vpop.xlane.xlu0 %733
    %v735 = vsub.f32 %v701, %v731
    %v736 = vsub.f32 %v727, %v734
    %v737 = vmul.f32 %v735, 1.442695
    %v738 = vpow.pop %v737
    %v739 = vmul.f32 %v736, 1.442695
    %v740 = vpow.pop %v739
    %v741 = vsel %vm164, %v738, 0.0
    %742 = vadd.xlane.f32.xlu0 %v741
    %v743 = vpop.xlane.xlu0 %742
    %v744 = vsel %vm164, %v740, 0.0
    %745 = vadd.xlane.f32.xlu0 %v744
    %v746 = vpop.xlane.xlu0 %745
    %v747 = vrcp.pop %v743
    %v748 = vmul.f32 %v743, %v747
    %v749 = vsub.f32 1.0, %v748
    %v750 = vmul.f32 %v747, %v749
    %v751 = vadd.f32 %v747, %v750
    %vm752 = vweird.f32 %v743
    %vm753 = vweird.f32 %v747
    %vm754 = vmor %vm752, %vm753
    %v755 = vsel %vm754, %v747, %v751
    %v756 = vand.u32 2147483647, %v743
    %vm757 = vcmp.eq.f32.partialorder %v756, 8.507059e+37
    %v758 = vand.u32 %v743, 2147483648
    %v759 = vor.u32 1.1754944e-38, %v758
    %v760 = vsel %vm757, %v759, %v755
    %v761 = vmul.f32 %v738, %v760
    %v762 = vrcp.pop %v746
    %v763 = vmul.f32 %v746, %v762
    %v764 = vsub.f32 1.0, %v763
    %v765 = vmul.f32 %v762, %v764
    %v766 = vadd.f32 %v762, %v765
    %vm767 = vweird.f32 %v746
    %vm768 = vweird.f32 %v762
    %vm769 = vmor %vm767, %vm768
    %v770 = vsel %vm769, %v762, %v766
    %v771 = vand.u32 2147483647, %v746
    %vm772 = vcmp.eq.f32.partialorder %v771, 8.507059e+37
    %v773 = vand.u32 %v746, 2147483648
    %v774 = vor.u32 1.1754944e-38, %v773
    %v775 = vsel %vm772, %v774, %v770
    %v776 = vmul.f32 %v740, %v775
    %v778 = vsel %vm164, %v761, 0
    %780 = vmatpush.msra.mxu0 0.0
    %781 = vmatpush.msra.mxu0 0.0
    %782 = vmatpush.msra.mxu0 0.0
    %783 = vmatpush.msra.mxu0 0.0
    %784 = vmatpush.msra.mxu0 0.0
    %785 = vmatpush.msra.mxu0 0.0
    %786 = vmatpush.msra.mxu0 0.0
    %787 = vmatpush.msra.mxu0 0.0
    %788 = vmatpush.msra.mxu0 0.0
    %789 = vmatpush.msra.mxu0 0.0
    %790 = vmatpush.msra.mxu0 0.0
    %791 = vmatpush.msra.mxu0 0.0
    %792 = vmatpush.msra.mxu0 0.0
    %793 = vmatpush.msra.mxu0 0.0
    %794 = vmatpush.msra.mxu0 0.0
    %795 = vmatpush.msra.mxu0 %v672
    %796 = vmatmul.f32.gmra.mxu0 %v778
    %v797 = vpop.f32.mrf.mxu0
    %v798 = vadd.f32 0.0, %v797
    %799 = vdwg.mxu0
    %v801 = vsel %vm164, %v776, 0
    %803 = vmatpush.msra.mxu0 0.0
    %804 = vmatpush.msra.mxu0 0.0
    %805 = vmatpush.msra.mxu0 0.0
    %806 = vmatpush.msra.mxu0 0.0
    %807 = vmatpush.msra.mxu0 0.0
    %808 = vmatpush.msra.mxu0 0.0
    %809 = vmatpush.msra.mxu0 0.0
    %810 = vmatpush.msra.mxu0 0.0
    %811 = vmatpush.msra.mxu0 0.0
    %812 = vmatpush.msra.mxu0 0.0
    %813 = vmatpush.msra.mxu0 0.0
    %814 = vmatpush.msra.mxu0 0.0
    %815 = vmatpush.msra.mxu0 0.0
    %816 = vmatpush.msra.mxu0 0.0
    %817 = vmatpush.msra.mxu0 0.0
    %818 = vmatpush.msra.mxu0 %v675
    %819 = vmatmul.f32.gmra.mxu0 %v801
    %v820 = vpop.f32.mrf.mxu0
    %v821 = vadd.f32 0.0, %v820
    %822 = vdwg.mxu0
    %v824 = vsel %vm164, %v798, 0
    %v827 = vsel %vm164, %v821, 0
    %829 = vmatpush.msra.mxu0 0.0
    %830 = vmatpush.msra.mxu0 0.0
    %831 = vmatpush.msra.mxu0 0.0
    %832 = vmatpush.msra.mxu0 0.0
    %833 = vmatpush.msra.mxu0 0.0
    %834 = vmatpush.msra.mxu0 0.0
    %835 = vmatpush.msra.mxu0 0.0
    %836 = vmatpush.msra.mxu0 0.0
    %837 = vmatpush.msra.mxu0 0.0
    %838 = vmatpush.msra.mxu0 0.0
    %839 = vmatpush.msra.mxu0 0.0
    %840 = vmatpush.msra.mxu0 0.0
    %841 = vmatpush.msra.mxu0 0.0
    %842 = vmatpush.msra.mxu0 0.0
    %843 = vmatpush.msra.mxu0 0.0
    %844 = vmatpush.msra.mxu0 %v596
    %845 = vmatmul.f32.gmra.mxu0 %v824
    %v846 = vpop.f32.mrf.mxu0
    %v847 = vadd.f32 0.0, %v846
    %848 = vmatmul.f32.gmra.mxu0 %v827
    %v849 = vpop.f32.mrf.mxu0
    %v850 = vadd.f32 0.0, %v849
    %851 = vdwg.mxu0
    %v852 = vadd.f32 %v591, %v847
    %v853 = vadd.f32 %v594, %v850
    %v854 = vld [vmem:[%s1 + $0x18] sm:$0xff]
    %v855 = vld [vmem:[%s1 + $0x38] sm:$0xff]
    %v856 = vld [vmem:[%s1 + $0x58] sm:$0xff]
    %v858 = vsel %vm73, %v854, 0
    %860 = vmatpush.xpose.msra.mxu0 0.0
    %861 = vmatpush.xpose.msra.mxu0 0.0
    %862 = vmatpush.xpose.msra.mxu0 0.0
    %863 = vmatpush.xpose.msra.mxu0 0.0
    %864 = vmatpush.xpose.msra.mxu0 0.0
    %865 = vmatpush.xpose.msra.mxu0 0.0
    %866 = vmatpush.xpose.msra.mxu0 0.0
    %867 = vmatpush.xpose.msra.mxu0 0.0
    %868 = vmatpush.xpose.msra.mxu0 0.0
    %869 = vmatpush.xpose.msra.mxu0 0.0
    %870 = vmatpush.xpose.msra.mxu0 0.0
    %871 = vmatpush.xpose.msra.mxu0 0.0
    %872 = vmatpush.xpose.msra.mxu0 0.0
    %873 = vmatpush.xpose.msra.mxu0 0.0
    %874 = vmatpush.xpose.msra.mxu0 0.0
    %875 = vmatpush.xpose.msra.mxu0 %v858
    %876 = vmatmul.f32.gmra.mxu0 %v75
    %v877 = vpop.f32.mrf.mxu0
    %v878 = vadd.f32 0.0, %v877
    %879 = vmatmul.f32.gmra.mxu0 %v78
    %v880 = vpop.f32.mrf.mxu0
    %v881 = vadd.f32 0.0, %v880
    %882 = vdwg.mxu0
    %v884 = vsel %vm73, %v855, 0
    %886 = vmatpush.xpose.msra.mxu0 0.0
    %887 = vmatpush.xpose.msra.mxu0 0.0
    %888 = vmatpush.xpose.msra.mxu0 0.0
    %889 = vmatpush.xpose.msra.mxu0 0.0
    %890 = vmatpush.xpose.msra.mxu0 0.0
    %891 = vmatpush.xpose.msra.mxu0 0.0
    %892 = vmatpush.xpose.msra.mxu0 0.0
    %893 = vmatpush.xpose.msra.mxu0 0.0
    %894 = vmatpush.xpose.msra.mxu0 0.0
    %895 = vmatpush.xpose.msra.mxu0 0.0
    %896 = vmatpush.xpose.msra.mxu0 0.0
    %897 = vmatpush.xpose.msra.mxu0 0.0
    %898 = vmatpush.xpose.msra.mxu0 0.0
    %899 = vmatpush.xpose.msra.mxu0 0.0
    %900 = vmatpush.xpose.msra.mxu0 0.0
    %901 = vmatpush.xpose.msra.mxu0 %v884
    %902 = vmatmul.f32.gmra.mxu0 %v107
    %v903 = vpop.f32.mrf.mxu0
    %v904 = vadd.f32 0.0, %v903
    %905 = vmatmul.f32.gmra.mxu0 %v110
    %v906 = vpop.f32.mrf.mxu0
    %v907 = vadd.f32 0.0, %v906
    %908 = vdwg.mxu0
    %v910 = vsel %vm73, %v856, 0
    %912 = vmatpush.xpose.msra.mxu0 0.0
    %913 = vmatpush.xpose.msra.mxu0 0.0
    %914 = vmatpush.xpose.msra.mxu0 0.0
    %915 = vmatpush.xpose.msra.mxu0 0.0
    %916 = vmatpush.xpose.msra.mxu0 0.0
    %917 = vmatpush.xpose.msra.mxu0 0.0
    %918 = vmatpush.xpose.msra.mxu0 0.0
    %919 = vmatpush.xpose.msra.mxu0 0.0
    %920 = vmatpush.xpose.msra.mxu0 0.0
    %921 = vmatpush.xpose.msra.mxu0 0.0
    %922 = vmatpush.xpose.msra.mxu0 0.0
    %923 = vmatpush.xpose.msra.mxu0 0.0
    %924 = vmatpush.xpose.msra.mxu0 0.0
    %925 = vmatpush.xpose.msra.mxu0 0.0
    %926 = vmatpush.xpose.msra.mxu0 0.0
    %927 = vmatpush.xpose.msra.mxu0 %v910
    %928 = vmatmul.f32.gmra.mxu0 %v107
    %v929 = vpop.f32.mrf.mxu0
    %v930 = vadd.f32 0.0, %v929
    %931 = vmatmul.f32.gmra.mxu0 %v110
    %v932 = vpop.f32.mrf.mxu0
    %v933 = vadd.f32 0.0, %v932
    %934 = vdwg.mxu0
    %v936 = vsel %vm164, %v878, 0
    %v939 = vsel %vm164, %v904, 0
    %941 = vmatpush.xpose.msra.mxu0 0.0
    %942 = vmatpush.xpose.msra.mxu0 0.0
    %943 = vmatpush.xpose.msra.mxu0 0.0
    %944 = vmatpush.xpose.msra.mxu0 0.0
    %945 = vmatpush.xpose.msra.mxu0 0.0
    %946 = vmatpush.xpose.msra.mxu0 0.0
    %947 = vmatpush.xpose.msra.mxu0 0.0
    %948 = vmatpush.xpose.msra.mxu0 0.0
    %949 = vmatpush.xpose.msra.mxu0 0.0
    %950 = vmatpush.xpose.msra.mxu0 0.0
    %951 = vmatpush.xpose.msra.mxu0 0.0
    %952 = vmatpush.xpose.msra.mxu0 0.0
    %953 = vmatpush.xpose.msra.mxu0 0.0
    %954 = vmatpush.xpose.msra.mxu0 0.0
    %955 = vmatpush.xpose.msra.mxu0 0.0
    %956 = vmatpush.xpose.msra.mxu0 %v939
    %957 = vmatmul.f32.gmra.mxu0 %v936
    %v958 = vpop.f32.mrf.mxu0
    %v959 = vadd.f32 0.0, %v958
    %960 = vdwg.mxu0
    %v962 = vsel %vm164, %v881, 0
    %v965 = vsel %vm164, %v907, 0
    %967 = vmatpush.xpose.msra.mxu0 0.0
    %968 = vmatpush.xpose.msra.mxu0 0.0
    %969 = vmatpush.xpose.msra.mxu0 0.0
    %970 = vmatpush.xpose.msra.mxu0 0.0
    %971 = vmatpush.xpose.msra.mxu0 0.0
    %972 = vmatpush.xpose.msra.mxu0 0.0
    %973 = vmatpush.xpose.msra.mxu0 0.0
    %974 = vmatpush.xpose.msra.mxu0 0.0
    %975 = vmatpush.xpose.msra.mxu0 0.0
    %976 = vmatpush.xpose.msra.mxu0 0.0
    %977 = vmatpush.xpose.msra.mxu0 0.0
    %978 = vmatpush.xpose.msra.mxu0 0.0
    %979 = vmatpush.xpose.msra.mxu0 0.0
    %980 = vmatpush.xpose.msra.mxu0 0.0
    %981 = vmatpush.xpose.msra.mxu0 0.0
    %982 = vmatpush.xpose.msra.mxu0 %v965
    %983 = vmatmul.f32.gmra.mxu0 %v962
    %v984 = vpop.f32.mrf.mxu0
    %v985 = vadd.f32 0.0, %v984
    %986 = vdwg.mxu0
    %v987 = vsel %vm164, %v959, -inf
    %988 = vmax.xlane.f32.xlu0 %v987
    %v989 = vpop.xlane.xlu0 %988
    %v990 = vsel %vm164, %v985, -inf
    %991 = vmax.xlane.f32.xlu0 %v990
    %v992 = vpop.xlane.xlu0 %991
    %v993 = vsub.f32 %v959, %v989
    %v994 = vsub.f32 %v985, %v992
    %v995 = vmul.f32 %v993, 1.442695
    %v996 = vpow.pop %v995
    %v997 = vmul.f32 %v994, 1.442695
    %v998 = vpow.pop %v997
    %v999 = vsel %vm164, %v996, 0.0
    %1000 = vadd.xlane.f32.xlu0 %v999
    %v1001 = vpop.xlane.xlu0 %1000
    %v1002 = vsel %vm164, %v998, 0.0
    %1003 = vadd.xlane.f32.xlu0 %v1002
    %v1004 = vpop.xlane.xlu0 %1003
    %v1005 = vrcp.pop %v1001
    %v1006 = vmul.f32 %v1001, %v1005
    %v1007 = vsub.f32 1.0, %v1006
    %v1008 = vmul.f32 %v1005, %v1007
    %v1009 = vadd.f32 %v1005, %v1008
    %vm1010 = vweird.f32 %v1001
    %vm1011 = vweird.f32 %v1005
    %vm1012 = vmor %vm1010, %vm1011
    %v1013 = vsel %vm1012, %v1005, %v1009
    %v1014 = vand.u32 2147483647, %v1001
    %vm1015 = vcmp.eq.f32.partialorder %v1014, 8.507059e+37
    %v1016 = vand.u32 %v1001, 2147483648
    %v1017 = vor.u32 1.1754944e-38, %v1016
    %v1018 = vsel %vm1015, %v1017, %v1013
    %v1019 = vmul.f32 %v996, %v1018
    %v1020 = vrcp.pop %v1004
    %v1021 = vmul.f32 %v1004, %v1020
    %v1022 = vsub.f32 1.0, %v1021
    %v1023 = vmul.f32 %v1020, %v1022
    %v1024 = vadd.f32 %v1020, %v1023
    %vm1025 = vweird.f32 %v1004
    %vm1026 = vweird.f32 %v1020
    %vm1027 = vmor %vm1025, %vm1026
    %v1028 = vsel %vm1027, %v1020, %v1024
    %v1029 = vand.u32 2147483647, %v1004
    %vm1030 = vcmp.eq.f32.partialorder %v1029, 8.507059e+37
    %v1031 = vand.u32 %v1004, 2147483648
    %v1032 = vor.u32 1.1754944e-38, %v1031
    %v1033 = vsel %vm1030, %v1032, %v1028
    %v1034 = vmul.f32 %v998, %v1033
    %v1036 = vsel %vm164, %v1019, 0
    %1038 = vmatpush.msra.mxu0 0.0
    %1039 = vmatpush.msra.mxu0 0.0
    %1040 = vmatpush.msra.mxu0 0.0
    %1041 = vmatpush.msra.mxu0 0.0
    %1042 = vmatpush.msra.mxu0 0.0
    %1043 = vmatpush.msra.mxu0 0.0
    %1044 = vmatpush.msra.mxu0 0.0
    %1045 = vmatpush.msra.mxu0 0.0
    %1046 = vmatpush.msra.mxu0 0.0
    %1047 = vmatpush.msra.mxu0 0.0
    %1048 = vmatpush.msra.mxu0 0.0
    %1049 = vmatpush.msra.mxu0 0.0
    %1050 = vmatpush.msra.mxu0 0.0
    %1051 = vmatpush.msra.mxu0 0.0
    %1052 = vmatpush.msra.mxu0 0.0
    %1053 = vmatpush.msra.mxu0 %v930
    %1054 = vmatmul.f32.gmra.mxu0 %v1036
    %v1055 = vpop.f32.mrf.mxu0
    %v1056 = vadd.f32 0.0, %v1055
    %1057 = vdwg.mxu0
    %v1059 = vsel %vm164, %v1034, 0
    %1061 = vmatpush.msra.mxu0 0.0
    %1062 = vmatpush.msra.mxu0 0.0
    %1063 = vmatpush.msra.mxu0 0.0
    %1064 = vmatpush.msra.mxu0 0.0
    %1065 = vmatpush.msra.mxu0 0.0
    %1066 = vmatpush.msra.mxu0 0.0
    %1067 = vmatpush.msra.mxu0 0.0
    %1068 = vmatpush.msra.mxu0 0.0
    %1069 = vmatpush.msra.mxu0 0.0
    %1070 = vmatpush.msra.mxu0 0.0
    %1071 = vmatpush.msra.mxu0 0.0
    %1072 = vmatpush.msra.mxu0 0.0
    %1073 = vmatpush.msra.mxu0 0.0
    %1074 = vmatpush.msra.mxu0 0.0
    %1075 = vmatpush.msra.mxu0 0.0
    %1076 = vmatpush.msra.mxu0 %v933
    %1077 = vmatmul.f32.gmra.mxu0 %v1059
    %v1078 = vpop.f32.mrf.mxu0
    %v1079 = vadd.f32 0.0, %v1078
    %1080 = vdwg.mxu0
    %v1082 = vsel %vm164, %v1056, 0
    %v1085 = vsel %vm164, %v1079, 0
    %1087 = vmatpush.msra.mxu0 0.0
    %1088 = vmatpush.msra.mxu0 0.0
    %1089 = vmatpush.msra.mxu0 0.0
    %1090 = vmatpush.msra.mxu0 0.0
    %1091 = vmatpush.msra.mxu0 0.0
    %1092 = vmatpush.msra.mxu0 0.0
    %1093 = vmatpush.msra.mxu0 0.0
    %1094 = vmatpush.msra.mxu0 0.0
    %1095 = vmatpush.msra.mxu0 0.0
    %1096 = vmatpush.msra.mxu0 0.0
    %1097 = vmatpush.msra.mxu0 0.0
    %1098 = vmatpush.msra.mxu0 0.0
    %1099 = vmatpush.msra.mxu0 0.0
    %1100 = vmatpush.msra.mxu0 0.0
    %1101 = vmatpush.msra.mxu0 0.0
    %1102 = vmatpush.msra.mxu0 %v854
    %1103 = vmatmul.f32.gmra.mxu0 %v1082
    %v1104 = vpop.f32.mrf.mxu0
    %v1105 = vadd.f32 0.0, %v1104
    %1106 = vmatmul.f32.gmra.mxu0 %v1085
    %v1107 = vpop.f32.mrf.mxu0
    %v1108 = vadd.f32 0.0, %v1107
    %1109 = vdwg.mxu0
    %v1110 = vadd.f32 %v852, %v1105
    %v1111 = vadd.f32 %v853, %v1108
    %v1112 = vadd.f32 %v1110, %v15
    %v1113 = vadd.f32 %v1111, %v16
    %vm1114 = vcmask 261120
    %v1116 = vsel %vm1114, %v1112, 0
    %v1119 = vsel %vm1114, %v1113, 0
    %1121 = vmatpush.msra.mxu0 0.0
    %1122 = vmatpush.msra.mxu0 0.0
    %1123 = vmatpush.msra.mxu0 0.0
    %1124 = vmatpush.msra.mxu0 0.0
    %1125 = vmatpush.msra.mxu0 0.0
    %1126 = vmatpush.msra.mxu0 0.0
    %1127 = vmatpush.msra.mxu0 0.0
    %1128 = vmatpush.msra.mxu0 0.0
    %1129 = vmatpush.msra.mxu0 0.0
    %1130 = vmatpush.msra.mxu0 0.0
    %1131 = vmatpush.msra.mxu0 0.0
    %1132 = vmatpush.msra.mxu0 0.0
    %1133 = vmatpush.msra.mxu0 0.03125
    %1134 = vmatpush.msra.mxu0 0.03125
    %1135 = vmatpush.msra.mxu0 0.03125
    %1136 = vmatpush.msra.mxu0 0.03125
    %1137 = vmatmul.f32.gmra.mxu0 %v1116
    %v1138 = vpop.f32.mrf.mxu0
    %v1139 = vadd.f32 0.0, %v1138
    %1140 = vmatmul.f32.gmra.mxu0 %v1119
    %v1141 = vpop.f32.mrf.mxu0
    %v1142 = vadd.f32 0.0, %v1141
    %1143 = vdwg.mxu0
    %1145 = vset.pattern.permute.xlu0 0
    %1146 = vperm.xlu0 %1145, %v1139
    %v1147 = vpop.permute.xlu0 %1146
    %1150 = vset.pattern.permute.xlu0 0
    %1151 = vperm.xlu0 %1150, %v1142
    %v1152 = vpop.permute.xlu0 %1151
    %v1154 = vsub.f32 %v1112, %v1147
    %v1155 = vsub.f32 %v1113, %v1152
    %v1156 = vmul.f32 %v1154, %v1154
    %v1157 = vmul.f32 %v1155, %v1155
    %v1159 = vsel %vm1114, %v1156, 0
    %v1162 = vsel %vm1114, %v1157, 0
    %1164 = vmatpush.msra.mxu0 0.0
    %1165 = vmatpush.msra.mxu0 0.0
    %1166 = vmatpush.msra.mxu0 0.0
    %1167 = vmatpush.msra.mxu0 0.0
    %1168 = vmatpush.msra.mxu0 0.0
    %1169 = vmatpush.msra.mxu0 0.0
    %1170 = vmatpush.msra.mxu0 0.0
    %1171 = vmatpush.msra.mxu0 0.0
    %1172 = vmatpush.msra.mxu0 0.0
    %1173 = vmatpush.msra.mxu0 0.0
    %1174 = vmatpush.msra.mxu0 0.0
    %1175 = vmatpush.msra.mxu0 0.0
    %1176 = vmatpush.msra.mxu0 0.03125
    %1177 = vmatpush.msra.mxu0 0.03125
    %1178 = vmatpush.msra.mxu0 0.03125
    %1179 = vmatpush.msra.mxu0 0.03125
    %1180 = vmatmul.f32.gmra.mxu0 %v1159
    %v1181 = vpop.f32.mrf.mxu0
    %v1182 = vadd.f32 0.0, %v1181
    %1183 = vmatmul.f32.gmra.mxu0 %v1162
    %v1184 = vpop.f32.mrf.mxu0
    %v1185 = vadd.f32 0.0, %v1184
    %1186 = vdwg.mxu0
    %v1187 = vld [vmem:[%s2 + $0x61] sm:$0x1]
    %v1188 = vld [vmem:[%s2 + $0x62] sm:$0x1]
    %v1189 = vadd.f32 %v1182, 1e-06
    %v1190 = vadd.f32 %v1185, 1e-06
    %v1191 = vrsqrt.pop %v1189
    %v1192 = vmul.f32 %v1191, %v1189
    %v1193 = vmul.f32 %v1192, %v1191
    %v1194 = vmul.f32 0.5, %v1193
    %v1195 = vsub.f32 1.5, %v1194
    %v1196 = vmul.f32 %v1191, %v1195
    %vm1197 = vweird.f32 %v1189
    %vm1198 = vweird.f32 %v1191
    %vm1199 = vmor %vm1197, %vm1198
    %v1200 = vsel %vm1199, %v1191, %v1196
    %v1201 = vrsqrt.pop %v1190
    %v1202 = vmul.f32 %v1201, %v1190
    %v1203 = vmul.f32 %v1202, %v1201
    %v1204 = vmul.f32 0.5, %v1203
    %v1205 = vsub.f32 1.5, %v1204
    %v1206 = vmul.f32 %v1201, %v1205
    %vm1207 = vweird.f32 %v1190
    %vm1208 = vweird.f32 %v1201
    %vm1209 = vmor %vm1207, %vm1208
    %v1210 = vsel %vm1209, %v1201, %v1206
    %1212 = vset.pattern.permute.xlu0 0
    %1213 = vperm.xlu0 %1212, %v1200
    %v1214 = vpop.permute.xlu0 %1213
    %1217 = vset.pattern.permute.xlu0 0
    %1218 = vperm.xlu0 %1217, %v1210
    %v1219 = vpop.permute.xlu0 %1218
    %v1221 = vmul.f32 %v1154, %v1214
    %v1222 = vmul.f32 %v1155, %v1219
    %v1223 = vperm.slane %v1187, 0
    %v1224 = vmul.f32 %v1221, %v1223
    %v1225 = vmul.f32 %v1222, %v1223
    %v1226 = vperm.slane %v1188, 0
    %v1227 = vadd.f32 %v1224, %v1226
    %v1228 = vadd.f32 %v1225, %v1226
    %v1229 = vld [vmem:[%s2] sm:$0xff]
    %v1230 = vld [vmem:[%s2 + $0x8] sm:$0xff]
    %v1231 = vld [vmem:[%s2 + $0x10] sm:$0xff]
    %v1232 = vld [vmem:[%s2 + $0x18] sm:$0xff]
    %v1233 = vld [vmem:[%s2 + $0x60] sm:$0x1]
    %v1234 = vperm.slane %v1233, 0
    %v1236 = vsel %vm1114, %v1227, 0
    %v1239 = vsel %vm1114, %v1228, 0
    %1241 = vmatpush.msra.mxu0 0.0
    %1242 = vmatpush.msra.mxu0 0.0
    %1243 = vmatpush.msra.mxu0 0.0
    %1244 = vmatpush.msra.mxu0 0.0
    %1245 = vmatpush.msra.mxu0 0.0
    %1246 = vmatpush.msra.mxu0 0.0
    %1247 = vmatpush.msra.mxu0 0.0
    %1248 = vmatpush.msra.mxu0 0.0
    %1249 = vmatpush.msra.mxu0 0.0
    %1250 = vmatpush.msra.mxu0 0.0
    %1251 = vmatpush.msra.mxu0 0.0
    %1252 = vmatpush.msra.mxu0 0.0
    %1253 = vmatpush.msra.mxu0 %v1232
    %1254 = vmatpush.msra.mxu0 %v1231
    %1255 = vmatpush.msra.mxu0 %v1230
    %1256 = vmatpush.msra.mxu0 %v1229
    %1257 = vmatmul.f32.gmra.mxu0 %v1236
    %v1258 = vpop.f32.mrf.mxu0
    %v1259 = vadd.f32 %v1234, %v1258
    %1260 = vmatmul.f32.gmra.mxu0 %v1239
    %v1261 = vpop.f32.mrf.mxu0
    %v1262 = vadd.f32 %v1234, %v1261
    %1263 = vdwg.mxu0
    %v1264 = vmax.f32 %v1259, 0.0
    %v1265 = vmax.f32 %v1262, 0.0
    %v1266 = vld [vmem:[%s2 + $0x20] sm:$0xff]
    %v1267 = vld [vmem:[%s2 + $0x28] sm:$0xff]
    %v1268 = vld [vmem:[%s2 + $0x30] sm:$0xff]
    %v1269 = vld [vmem:[%s2 + $0x38] sm:$0xff]
    %v1270 = vld [vmem:[%s2 + $0x40] sm:$0xff]
    %v1271 = vld [vmem:[%s2 + $0x48] sm:$0xff]
    %v1272 = vld [vmem:[%s2 + $0x50] sm:$0xff]
    %v1273 = vld [vmem:[%s2 + $0x58] sm:$0xff]
    %vm1274 = vcmask 523264
    %v1276 = vsel %vm1274, %v1264, 0
    %v1279 = vsel %vm1274, %v1265, 0
    %1281 = vmatpush.msra.mxu0 0.0
    %1282 = vmatpush.msra.mxu0 0.0
    %1283 = vmatpush.msra.mxu0 0.0
    %1284 = vmatpush.msra.mxu0 0.0
    %1285 = vmatpush.msra.mxu0 0.0
    %1286 = vmatpush.msra.mxu0 0.0
    %1287 = vmatpush.msra.mxu0 0.0
    %1288 = vmatpush.msra.mxu0 0.0
    %1289 = vmatpush.msra.mxu0 %v1273
    %1290 = vmatpush.msra.mxu0 %v1272
    %1291 = vmatpush.msra.mxu0 %v1271
    %1292 = vmatpush.msra.mxu0 %v1270
    %1293 = vmatpush.msra.mxu0 %v1269
    %1294 = vmatpush.msra.mxu0 %v1268
    %1295 = vmatpush.msra.mxu0 %v1267
    %1296 = vmatpush.msra.mxu0 %v1266
    %1297 = vmatmul.f32.gmra.mxu0 %v1276
    %v1298 = vpop.f32.mrf.mxu0
    %v1299 = vadd.f32 0.0, %v1298
    %1300 = vmatmul.f32.gmra.mxu0 %v1279
    %v1301 = vpop.f32.mrf.mxu0
    %v1302 = vadd.f32 0.0, %v1301
    %1303 = vdwg.mxu0
    %v1304 = vld [vmem:[%s2 + $0x63] sm:$0x1]
    %v1305 = vperm.slane %v1304, 0
    %v1306 = vadd.f32 %v1299, %v1305
    %v1307 = vadd.f32 %v1302, %v1305
    %v1308 = vadd.f32 %v1306, %v1227
    %v1309 = vadd.f32 %v1307, %v1228
    %1310 = vst.msk [vmem:[#allocation2] sm:$0xff] %vm1114, %v1308
    %1311 = vst.msk [vmem:[#allocation2 + $0x8] sm:$0xff] %vm1114, %v1309
    // Predicated region
    $region14: #{tpu_custom_call.1} parent=1 // pred_check
      _
    $region15: #{tpu_custom_call.1} parent=1 // pred_check_branch
      %1313 = sbr.rel (0) target = $region17
    $region16: #{tpu_custom_call.1} parent=1 // pred_region
      %1315 = vsyncadd [#allocation3], 0
      %s1316 = sshll.u32 [#allocation2], 4
      %s1317 = int_to_ptr.vmem [resolvable:$true] %s1316
      %s1318 = sshll.u32 %s3, 4
      %s1319 = int_to_ptr.hbm [resolvable:$true] %s1318
      %1324 = dma.vmem_to_hbm [thread:$0]  %s1317, 256, %s1319, [#allocation3], 128, 128, 8
    $region17: #{tpu_custom_call.1} parent=1 // pred_fallthru
      _
    // Predicated region
    $region18: #{tpu_custom_call.1} parent=1 // pred_check
      _
    $region19: #{tpu_custom_call.1} parent=1 // pred_check_branch
      %1326 = sbr.rel (0) target = $region21
    $region20: #{tpu_custom_call.1} parent=1 // pred_region
      %1328 = dma.done [#allocation3], 256
    $region21: #{tpu_custom_call.1} parent=1 // pred_fallthru
      _
    %1329 = vsyncpa [#allocation3], 1

</llo_original>
